<compile_context>
chip_gen: v7x
topology: tpu7x:2x2x1
jax: 0.10.0
libtpu: 0.0.40
codegen_flags: <defaults>
</compile_context>

<pallas_src>
import numpy as np
import jax
import jax.numpy as jnp
from jax.experimental import pallas as pl
from jax.experimental.pallas import tpu as pltpu

ATOM_FDIM = 24
BOND_FDIM = 35            # chemprop: bond_fdim = atom_fdim + raw bond features
HIDDEN = 32
DEPTH = 3                 # chemprop default depth -> 2 message-passing steps
N_MOLS = 2

AF_P = 128                # atom-feature lane pad
BF_P = 128                # bond-feature lane pad
H_P = 128                 # hidden lane pad
NA_P = 128                # atoms per graph (sublane pad)
NB_P = 128                # bonds per graph (sublane pad)
M_P = 8                   # molecules (output rows)
NA2 = 2 * NA_P            # packed atoms (graph1 rows 0..127, graph2 rows 128..255)
NB2 = 2 * NB_P            # packed bonds


def _pad2(x, r, c):
    out = np.zeros((r, c), np.float32)
    out[: x.shape[0], : x.shape[1]] = x
    return out


def build_graph(key, atoms_per_mol):
    """Synthetic chemprop-style BatchMolGraph (chain molecules).
    Index 0 of atoms/bonds is chemprop's zero-padding row."""
    n_atoms, n_bonds = 1, 1
    a2b = [[]]
    b2a = [0]
    b2revb = [0]
    a_scope = []
    for k in atoms_per_mol:
        start = n_atoms
        for _ in range(k):
            a2b.append([])
        for i in range(k - 1):
            u, v = start + i, start + i + 1
            b1, b2 = n_bonds, n_bonds + 1
            a2b[v].append(b1)        # b1 = u->v, incoming to v
            a2b[u].append(b2)        # b2 = v->u, incoming to u
            b2a += [u, v]
            b2revb += [b2, b1]
            n_bonds += 2
        a_scope.append((start, k))
        n_atoms += k

    max_nb = max(len(lst) for lst in a2b)
    a2b_arr = np.zeros((n_atoms, max_nb), np.int32)
    for a, lst in enumerate(a2b):
        a2b_arr[a, : len(lst)] = lst

    k1, k2 = jax.random.split(key)
    f_atoms = np.array(jax.random.normal(k1, (n_atoms, ATOM_FDIM), jnp.float32))
    f_bonds = np.array(jax.random.normal(k2, (n_bonds, BOND_FDIM), jnp.float32))
    f_atoms[0] = 0.0
    f_bonds[0] = 0.0

    return dict(f_atoms=f_atoms, f_bonds=f_bonds, a2b_list=a2b, a2b=a2b_arr,
                b2a=np.array(b2a, np.int32), b2revb=np.array(b2revb, np.int32),
                a_scope=a_scope, n_atoms=n_atoms, n_bonds=n_bonds)


def dense_graph(raw):
    """Dense incidence matrices + fused bond-transition matrix (host, once)."""
    A2B = np.zeros((NA_P, NB_P), np.float32)
    for a, lst in enumerate(raw['a2b_list']):
        for b in lst:
            A2B[a, b] = 1.0
    B2A = np.zeros((NB_P, NA_P), np.float32)
    REV = np.zeros((NB_P, NB_P), np.float32)
    for b in range(raw['n_bonds']):
        B2A[b, raw['b2a'][b]] = 1.0
        REV[b, raw['b2revb'][b]] = 1.0
    # msg_new = a_msg[b2a] - msg[b2revb] = (B2A @ A2B - REV) @ msg
    P = B2A @ A2B - REV
    return A2B, P


def pack_batch(raw1, raw2):
    """Pack both graphs into one set of block-diagonal operands."""
    A2B1, P1 = dense_graph(raw1)
    A2B2, P2 = dense_graph(raw2)

    f_atoms = np.zeros((NA2, AF_P), np.float32)
    f_atoms[: raw1['n_atoms'], :ATOM_FDIM] = raw1['f_atoms']
    f_atoms[NA_P: NA_P + raw2['n_atoms'], :ATOM_FDIM] = raw2['f_atoms']

    f_bonds = np.zeros((NB2, BF_P), np.float32)
    f_bonds[: raw1['n_bonds'], :BOND_FDIM] = raw1['f_bonds']
    f_bonds[NB_P: NB_P + raw2['n_bonds'], :BOND_FDIM] = raw2['f_bonds']

    P = np.zeros((NB2, NB2), np.float32)
    P[:NB_P, :NB_P] = P1
    P[NB_P:, NB_P:] = P2

    A2B = np.zeros((NA2, NB2), np.float32)
    A2B[:NA_P, :NB_P] = A2B1
    A2B[NA_P:, NB_P:] = A2B2

    # SCOPE carries the mean scale AND the graph1 - graph2 sign:
    #   graph1 block -> +1/a_size, graph2 block -> -1/a_size
    SCOPE = np.zeros((M_P, NA2), np.float32)
    for i, (s, sz) in enumerate(raw1['a_scope']):
        SCOPE[i, s: s + sz] = 1.0 / sz
    for i, (s, sz) in enumerate(raw2['a_scope']):
        SCOPE[i, NA_P + s: NA_P + s + sz] = -1.0 / sz
    # a_size == 0 (cached_zero_vector branch) never occurs for these graphs

    return f_atoms, f_bonds, P, A2B, SCOPE


def mpn_encoder_kernel(f_atoms_ref, f_bonds_ref, p_ref, a2b_ref, scope_ref,
                       w_i_ref, w_h_ref, w_oa_ref, w_oh_ref, b_o_ref,
                       out_ref):
    # W_i + ReLU (bias=False, chemprop default)
    inp = jnp.dot(f_bonds_ref[...], w_i_ref[...],
                  preferred_element_type=jnp.float32)
    message = jnp.maximum(inp, 0.0)

    P = p_ref[...]
    w_h = w_h_ref[...]
    for _ in range(DEPTH - 1):
        # fused (B2A @ A2B - REV) @ message : one gather matmul instead of three
        message = jnp.dot(P, message, preferred_element_type=jnp.float32)
        message = jnp.dot(message, w_h, preferred_element_type=jnp.float32)
        message = jnp.maximum(inp + message, 0.0)
        # dropout_layer: identity in eval mode

    a_message = jnp.dot(a2b_ref[...], message, preferred_element_type=jnp.float32)
    # W_o([f_atoms ; a_message]) split into two matmuls + bias
    atom_hiddens = jnp.maximum(
        jnp.dot(f_atoms_ref[...], w_oa_ref[...], preferred_element_type=jnp.float32)
        + jnp.dot(a_message, w_oh_ref[...], preferred_element_type=jnp.float32)
        + b_o_ref[...], 0.0)
    # (padded atom rows get ReLU(b_o) != 0 but SCOPE zeroes them in the readout)

    # per-molecule mean readout + (graph1 - graph2) fused into SCOPE
    out_ref[...] = jnp.dot(scope_ref[...], atom_hiddens,
                           preferred_element_type=jnp.float32)


@jax.jit
def mpn_forward(f_atoms, f_bonds, P, A2B, SCOPE, w_i, w_h, w_oa, w_oh, b_o):
    args = (f_atoms, f_bonds, P, A2B, SCOPE, w_i, w_h, w_oa, w_oh, b_o)

    def full(a):
        nd = a.ndim
        return pl.BlockSpec(a.shape, lambda i, _nd=nd: (0,) * _nd)

    return pl.pallas_call(
        mpn_encoder_kernel,
        out_shape=jax.ShapeDtypeStruct((M_P, H_P), jnp.float32),
        grid=(1,),
        in_specs=[full(a) for a in args],
        out_specs=pl.BlockSpec((M_P, H_P), lambda i: (0, 0)),
        compiler_params=pltpu.CompilerParams(
            dimension_semantics=("arbitrary",)),
    )(*args)


def encoder_ref(raw, w_i, w_h, w_oa, w_oh, b_o):
    """Pure-JAX reference using the original gather semantics."""
    fa = jnp.asarray(raw['f_atoms'])
    fb = jnp.asarray(raw['f_bonds'])
    a2b = jnp.asarray(raw['a2b'])
    b2a = jnp.asarray(raw['b2a'])
    b2revb = jnp.asarray(raw['b2revb'])

    inp = fb @ w_i
    message = jax.nn.relu(inp)
    for _ in range(DEPTH - 1):
        a_msg = message[a2b].sum(axis=1)          # index_select_ND + sum
        rev = message[b2revb]
        message = a_msg[b2a] - rev
        message = message @ w_h
        message = jax.nn.relu(inp + message)
    a_msg = message[a2b].sum(axis=1)
    atom_hiddens = jax.nn.relu(fa @ w_oa + a_msg @ w_oh + b_o)
    mols = []
    for s, sz in raw['a_scope']:
        mols.append(atom_hiddens[s: s + sz].sum(axis=0) / sz)
    return jnp.stack(mols)


if __name__ == "__main__":
    key = jax.random.PRNGKey(0)
    kg1, kg2, kw = jax.random.split(key, 3)

    raw1 = build_graph(kg1, [4, 5])   # graph batch 1 (2 molecules)
    raw2 = build_graph(kg2, [3, 6])   # graph batch 2 (2 molecules)

    kwi, kwh, kwoa, kwoh, kbo = jax.random.split(kw, 5)
    s = 0.1
    w_i = np.array(jax.random.normal(kwi, (BOND_FDIM, HIDDEN), jnp.float32)) * s
    w_h = np.array(jax.random.normal(kwh, (HIDDEN, HIDDEN), jnp.float32)) * s
    w_oa = np.array(jax.random.normal(kwoa, (ATOM_FDIM, HIDDEN), jnp.float32)) * s
    w_oh = np.array(jax.random.normal(kwoh, (HIDDEN, HIDDEN), jnp.float32)) * s
    b_o = np.array(jax.random.normal(kbo, (1, HIDDEN), jnp.float32)) * s

    f_atoms, f_bonds, P, A2B, SCOPE = pack_batch(raw1, raw2)

    args = (jnp.asarray(f_atoms), jnp.asarray(f_bonds), jnp.asarray(P),
            jnp.asarray(A2B), jnp.asarray(SCOPE),
            jnp.asarray(_pad2(w_i, BF_P, H_P)),
            jnp.asarray(_pad2(w_h, H_P, H_P)),
            jnp.asarray(_pad2(w_oa, AF_P, H_P)),
            jnp.asarray(_pad2(w_oh, H_P, H_P)),
            jnp.asarray(_pad2(b_o, 1, H_P)))

    out_pad = jax.block_until_ready(mpn_forward(*args))
    out = np.asarray(out_pad)[:N_MOLS, :HIDDEN]

    ref = np.asarray(encoder_ref(raw1, w_i, w_h, w_oa, w_oh, b_o)
                     - encoder_ref(raw2, w_i, w_h, w_oa, w_oh, b_o))
    np.testing.assert_allclose(out, ref, rtol=1e-4, atol=1e-4)
    print("KERNEL_OK")
</pallas_src>

<mosaic_0001>
module attributes {stable_mosaic.version = 11 : i64} {
  func.func @mpn_encoder_kernel(%arg0: i32, %arg1: memref<256x128xf32, #tpu.memory_space<vmem>>, %arg2: memref<256x128xf32, #tpu.memory_space<vmem>>, %arg3: memref<256x256xf32, #tpu.memory_space<vmem>>, %arg4: memref<256x256xf32, #tpu.memory_space<vmem>>, %arg5: memref<8x256xf32, #tpu.memory_space<vmem>>, %arg6: memref<128x128xf32, #tpu.memory_space<vmem>>, %arg7: memref<128x128xf32, #tpu.memory_space<vmem>>, %arg8: memref<128x128xf32, #tpu.memory_space<vmem>>, %arg9: memref<128x128xf32, #tpu.memory_space<vmem>>, %arg10: memref<1x128xf32, #tpu.memory_space<vmem>>, %arg11: memref<8x128xf32, #tpu.memory_space<vmem>>) attributes {dimension_semantics = [#tpu.dimension_semantics<arbitrary>], iteration_bounds = array<i64: 1>, scalar_prefetch = 0 : i64, scratch_operands = 0 : i64, tpu.core_type = #tpu.core_type<tc>, window_params = [{pipeline_mode = #tpu.pipeline_mode<synchronous>, transform_indices = @transform_0, window_bounds = array<i64: 256, 128>}, {pipeline_mode = #tpu.pipeline_mode<synchronous>, transform_indices = @transform_1, window_bounds = array<i64: 256, 128>}, {pipeline_mode = #tpu.pipeline_mode<synchronous>, transform_indices = @transform_2, window_bounds = array<i64: 256, 256>}, {pipeline_mode = #tpu.pipeline_mode<synchronous>, transform_indices = @transform_3, window_bounds = array<i64: 256, 256>}, {pipeline_mode = #tpu.pipeline_mode<synchronous>, transform_indices = @transform_4, window_bounds = array<i64: 8, 256>}, {pipeline_mode = #tpu.pipeline_mode<synchronous>, transform_indices = @transform_5, window_bounds = array<i64: 128, 128>}, {pipeline_mode = #tpu.pipeline_mode<synchronous>, transform_indices = @transform_6, window_bounds = array<i64: 128, 128>}, {pipeline_mode = #tpu.pipeline_mode<synchronous>, transform_indices = @transform_7, window_bounds = array<i64: 128, 128>}, {pipeline_mode = #tpu.pipeline_mode<synchronous>, transform_indices = @transform_8, window_bounds = array<i64: 128, 128>}, {pipeline_mode = #tpu.pipeline_mode<synchronous>, transform_indices = @transform_9, window_bounds = array<i64: 1, 128>}, {pipeline_mode = #tpu.pipeline_mode<synchronous>, transform_indices = @transform_10, window_bounds = array<i64: 8, 128>}]} {
    %c0 = arith.constant 0 : index
    %c0_0 = arith.constant 0 : index
    %0 = vector.load %arg2[%c0, %c0_0] : memref<256x128xf32, #tpu.memory_space<vmem>>, vector<256x128xf32>
    %c0_1 = arith.constant 0 : index
    %c0_2 = arith.constant 0 : index
    %1 = vector.load %arg6[%c0_1, %c0_2] : memref<128x128xf32, #tpu.memory_space<vmem>>, vector<128x128xf32>
    %cst = arith.constant dense<0.000000e+00> : vector<256x128xf32>
    %2 = tpu.matmul %0, %1, %cst {dimension_numbers = #tpu.dot_dimension_numbers<[1], [0], [0], [1], [0, 0, 1, 1], [], []>} : vector<256x128xf32>, vector<128x128xf32>, vector<256x128xf32> -> vector<256x128xf32>
    %cst_3 = arith.constant 0.000000e+00 : f32
    %3 = vector.broadcast %cst_3 : f32 to vector<256x128xf32>
    %4 = arith.maximumf %2, %3 : vector<256x128xf32>
    %c0_4 = arith.constant 0 : index
    %c0_5 = arith.constant 0 : index
    %5 = vector.load %arg3[%c0_4, %c0_5] : memref<256x256xf32, #tpu.memory_space<vmem>>, vector<256x256xf32>
    %c0_6 = arith.constant 0 : index
    %c0_7 = arith.constant 0 : index
    %6 = vector.load %arg7[%c0_6, %c0_7] : memref<128x128xf32, #tpu.memory_space<vmem>>, vector<128x128xf32>
    %cst_8 = arith.constant dense<0.000000e+00> : vector<256x128xf32>
    %7 = tpu.matmul %5, %4, %cst_8 {dimension_numbers = #tpu.dot_dimension_numbers<[1], [0], [0], [1], [0, 0, 1, 1], [], []>} : vector<256x256xf32>, vector<256x128xf32>, vector<256x128xf32> -> vector<256x128xf32>
    %cst_9 = arith.constant dense<0.000000e+00> : vector<256x128xf32>
    %8 = tpu.matmul %7, %6, %cst_9 {dimension_numbers = #tpu.dot_dimension_numbers<[1], [0], [0], [1], [0, 0, 1, 1], [], []>} : vector<256x128xf32>, vector<128x128xf32>, vector<256x128xf32> -> vector<256x128xf32>
    %9 = arith.addf %2, %8 : vector<256x128xf32>
    %cst_10 = arith.constant 0.000000e+00 : f32
    %10 = vector.broadcast %cst_10 : f32 to vector<256x128xf32>
    %11 = arith.maximumf %9, %10 : vector<256x128xf32>
    %cst_11 = arith.constant dense<0.000000e+00> : vector<256x128xf32>
    %12 = tpu.matmul %5, %11, %cst_11 {dimension_numbers = #tpu.dot_dimension_numbers<[1], [0], [0], [1], [0, 0, 1, 1], [], []>} : vector<256x256xf32>, vector<256x128xf32>, vector<256x128xf32> -> vector<256x128xf32>
    %cst_12 = arith.constant dense<0.000000e+00> : vector<256x128xf32>
    %13 = tpu.matmul %12, %6, %cst_12 {dimension_numbers = #tpu.dot_dimension_numbers<[1], [0], [0], [1], [0, 0, 1, 1], [], []>} : vector<256x128xf32>, vector<128x128xf32>, vector<256x128xf32> -> vector<256x128xf32>
    %14 = arith.addf %2, %13 : vector<256x128xf32>
    %cst_13 = arith.constant 0.000000e+00 : f32
    %15 = vector.broadcast %cst_13 : f32 to vector<256x128xf32>
    %16 = arith.maximumf %14, %15 : vector<256x128xf32>
    %c0_14 = arith.constant 0 : index
    %c0_15 = arith.constant 0 : index
    %17 = vector.load %arg4[%c0_14, %c0_15] : memref<256x256xf32, #tpu.memory_space<vmem>>, vector<256x256xf32>
    %cst_16 = arith.constant dense<0.000000e+00> : vector<256x128xf32>
    %18 = tpu.matmul %17, %16, %cst_16 {dimension_numbers = #tpu.dot_dimension_numbers<[1], [0], [0], [1], [0, 0, 1, 1], [], []>} : vector<256x256xf32>, vector<256x128xf32>, vector<256x128xf32> -> vector<256x128xf32>
    %c0_17 = arith.constant 0 : index
    %c0_18 = arith.constant 0 : index
    %19 = vector.load %arg1[%c0_17, %c0_18] : memref<256x128xf32, #tpu.memory_space<vmem>>, vector<256x128xf32>
    %c0_19 = arith.constant 0 : index
    %c0_20 = arith.constant 0 : index
    %20 = vector.load %arg8[%c0_19, %c0_20] : memref<128x128xf32, #tpu.memory_space<vmem>>, vector<128x128xf32>
    %cst_21 = arith.constant dense<0.000000e+00> : vector<256x128xf32>
    %21 = tpu.matmul %19, %20, %cst_21 {dimension_numbers = #tpu.dot_dimension_numbers<[1], [0], [0], [1], [0, 0, 1, 1], [], []>} : vector<256x128xf32>, vector<128x128xf32>, vector<256x128xf32> -> vector<256x128xf32>
    %c0_22 = arith.constant 0 : index
    %c0_23 = arith.constant 0 : index
    %22 = vector.load %arg9[%c0_22, %c0_23] : memref<128x128xf32, #tpu.memory_space<vmem>>, vector<128x128xf32>
    %cst_24 = arith.constant dense<0.000000e+00> : vector<256x128xf32>
    %23 = tpu.matmul %18, %22, %cst_24 {dimension_numbers = #tpu.dot_dimension_numbers<[1], [0], [0], [1], [0, 0, 1, 1], [], []>} : vector<256x128xf32>, vector<128x128xf32>, vector<256x128xf32> -> vector<256x128xf32>
    %24 = arith.addf %21, %23 : vector<256x128xf32>
    %c0_25 = arith.constant 0 : index
    %c0_26 = arith.constant 0 : index
    %25 = vector.load %arg10[%c0_25, %c0_26] : memref<1x128xf32, #tpu.memory_space<vmem>>, vector<1x128xf32>
    %26 = vector.broadcast %25 : vector<1x128xf32> to vector<256x128xf32>
    %27 = arith.addf %24, %26 : vector<256x128xf32>
    %cst_27 = arith.constant 0.000000e+00 : f32
    %28 = vector.broadcast %cst_27 : f32 to vector<256x128xf32>
    %29 = arith.maximumf %27, %28 : vector<256x128xf32>
    %c0_28 = arith.constant 0 : index
    %c0_29 = arith.constant 0 : index
    %30 = vector.load %arg5[%c0_28, %c0_29] : memref<8x256xf32, #tpu.memory_space<vmem>>, vector<8x256xf32>
    %cst_30 = arith.constant dense<0.000000e+00> : vector<8x128xf32>
    %31 = tpu.matmul %30, %29, %cst_30 {dimension_numbers = #tpu.dot_dimension_numbers<[1], [0], [0], [1], [0, 0, 1, 1], [], []>} : vector<8x256xf32>, vector<256x128xf32>, vector<8x128xf32> -> vector<8x128xf32>
    %c0_31 = arith.constant 0 : index
    %c0_32 = arith.constant 0 : index
    %32 = vector.load %arg11[%c0_31, %c0_32] : memref<8x128xf32, #tpu.memory_space<vmem>>, vector<8x128xf32>
    tpu.vector_store %arg11[%c0_31, %c0_32], %31 {strides = array<i32>} : memref<8x128xf32, #tpu.memory_space<vmem>>, vector<8x128xf32>,
    return
  }
  func.func @transform_0(%arg0: i32) -> (i32, i32) {
    %c0_i32 = arith.constant 0 : i32
    %c0_i32_0 = arith.constant 0 : i32
    %c0_i32_1 = arith.constant 0 : i32
    return %c0_i32, %c0_i32_0 : i32, i32
  }
  func.func @transform_1(%arg0: i32) -> (i32, i32) {
    %c0_i32 = arith.constant 0 : i32
    %c0_i32_0 = arith.constant 0 : i32
    %c0_i32_1 = arith.constant 0 : i32
    return %c0_i32, %c0_i32_0 : i32, i32
  }
  func.func @transform_2(%arg0: i32) -> (i32, i32) {
    %c0_i32 = arith.constant 0 : i32
    %c0_i32_0 = arith.constant 0 : i32
    %c0_i32_1 = arith.constant 0 : i32
    return %c0_i32, %c0_i32_0 : i32, i32
  }
  func.func @transform_3(%arg0: i32) -> (i32, i32) {
    %c0_i32 = arith.constant 0 : i32
    %c0_i32_0 = arith.constant 0 : i32
    %c0_i32_1 = arith.constant 0 : i32
    return %c0_i32, %c0_i32_0 : i32, i32
  }
  func.func @transform_4(%arg0: i32) -> (i32, i32) {
    %c0_i32 = arith.constant 0 : i32
    %c0_i32_0 = arith.constant 0 : i32
    %c0_i32_1 = arith.constant 0 : i32
    return %c0_i32, %c0_i32_0 : i32, i32
  }
  func.func @transform_5(%arg0: i32) -> (i32, i32) {
    %c0_i32 = arith.constant 0 : i32
    %c0_i32_0 = arith.constant 0 : i32
    %c0_i32_1 = arith.constant 0 : i32
    return %c0_i32, %c0_i32_0 : i32, i32
  }
  func.func @transform_6(%arg0: i32) -> (i32, i32) {
    %c0_i32 = arith.constant 0 : i32
    %c0_i32_0 = arith.constant 0 : i32
    %c0_i32_1 = arith.constant 0 : i32
    return %c0_i32, %c0_i32_0 : i32, i32
  }
  func.func @transform_7(%arg0: i32) -> (i32, i32) {
    %c0_i32 = arith.constant 0 : i32
    %c0_i32_0 = arith.constant 0 : i32
    %c0_i32_1 = arith.constant 0 : i32
    return %c0_i32, %c0_i32_0 : i32, i32
  }
  func.func @transform_8(%arg0: i32) -> (i32, i32) {
    %c0_i32 = arith.constant 0 : i32
    %c0_i32_0 = arith.constant 0 : i32
    %c0_i32_1 = arith.constant 0 : i32
    return %c0_i32, %c0_i32_0 : i32, i32
  }
  func.func @transform_9(%arg0: i32) -> (i32, i32) {
    %c0_i32 = arith.constant 0 : i32
    %c0_i32_0 = arith.constant 0 : i32
    %c0_i32_1 = arith.constant 0 : i32
    return %c0_i32, %c0_i32_0 : i32, i32
  }
  func.func @transform_10(%arg0: i32) -> (i32, i32) {
    %c0_i32 = arith.constant 0 : i32
    %c0_i32_0 = arith.constant 0 : i32
    %c0_i32_1 = arith.constant 0 : i32
    return %c0_i32, %c0_i32_0 : i32, i32
  }
}

</mosaic_0001>

<llo_original>
// kernel: mpn_forward.1
$region0: #{mpn_forward.1}
  #allocation0 [shape = 'u32[]', space=smem, size = 0x4, offset = 0x4, fixed_abs, tag = 'smem constant byte address 0x4 - core index']
  #allocation1 [shape = 'u32[144,128]{1,0:T(1,128)}', space=vmem, size = 0x12000, scoped, tag = 'internal scratch']
  %s0 = inlined_call_operand.hbm [shape: f32[256,128], index: 0, kind: input, shape index: {}]
  %s1 = inlined_call_operand.hbm [shape: f32[256,128], index: 1, kind: input, shape index: {}]
  %s2 = inlined_call_operand.hbm [shape: f32[256,256], index: 2, kind: input, shape index: {}]
  %s3 = inlined_call_operand.hbm [shape: f32[256,256], index: 3, kind: input, shape index: {}]
  %s4 = inlined_call_operand.hbm [shape: f32[8,256], index: 4, kind: input, shape index: {}]
  %s5 = inlined_call_operand.hbm [shape: f32[128,128], index: 5, kind: input, shape index: {}]
  %s6 = inlined_call_operand.hbm [shape: f32[128,128], index: 6, kind: input, shape index: {}]
  %s7 = inlined_call_operand.hbm [shape: f32[128,128], index: 7, kind: input, shape index: {}]
  %s8 = inlined_call_operand.hbm [shape: f32[128,128], index: 8, kind: input, shape index: {}]
  %s9 = inlined_call_operand.vmem [shape: f32[1,128], index: 9, kind: input, shape index: {}]
  %s10 = inlined_call_operand.hbm [shape: f32[8,128], index: 10, kind: output, shape index: {}]
  %s11 = sld [smem:[#allocation0]]
  $region86: #{mpn_forward.1} parent=0
    _
  %s13 = ssub.s32 1, %s11
  %s14 = scalar_select 0, %s13, %s11
  $region1: #{mpn_forward.1} parent=0
    #allocation2 [shape = 'u8[131072]{0}', space=vmem, size = 0x20000, scoped, tag = 'input window, operand 0, single buffered']
    #allocation3 [shape = 's32[1]{0}', space=sflag, size = 0x4, scoped, tag = 'scoped memory for mpn_forward.1']
    #allocation4 [shape = 's32[1]{0}', space=sflag, size = 0x4, scoped, tag = 'scoped memory for mpn_forward.1']
    #allocation5 [shape = 'u8[131072]{0}', space=vmem, size = 0x20000, scoped, tag = 'input window, operand 1, single buffered']
    #allocation6 [shape = 's32[1]{0}', space=sflag, size = 0x4, scoped, tag = 'scoped memory for mpn_forward.1']
    #allocation7 [shape = 'u8[262144]{0}', space=vmem, size = 0x40000, scoped, tag = 'input window, operand 2, single buffered']
    #allocation8 [shape = 'u8[262144]{0}', space=vmem, size = 0x40000, scoped, tag = 'input window, operand 3, single buffered']
    #allocation9 [shape = 's32[1]{0}', space=sflag, size = 0x4, scoped, tag = 'scoped memory for mpn_forward.1']
    #allocation10 [shape = 'u8[8192]{0}', space=vmem, size = 0x2000, scoped, tag = 'input window, operand 4, single buffered']
    #allocation11 [shape = 'u8[65536]{0}', space=vmem, size = 0x10000, scoped, tag = 'input window, operand 5, single buffered']
    #allocation12 [shape = 's32[1]{0}', space=sflag, size = 0x4, scoped, tag = 'scoped memory for mpn_forward.1']
    #allocation13 [shape = 'u8[65536]{0}', space=vmem, size = 0x10000, scoped, tag = 'input window, operand 6, single buffered']
    #allocation14 [shape = 'u8[65536]{0}', space=vmem, size = 0x10000, scoped, tag = 'input window, operand 7, single buffered']
    #allocation15 [shape = 's32[1]{0}', space=sflag, size = 0x4, scoped, tag = 'scoped memory for mpn_forward.1']
    #allocation16 [shape = 'u8[65536]{0}', space=vmem, size = 0x10000, scoped, tag = 'input window, operand 8, single buffered']
    #allocation17 [shape = 'u8[4096]{0}', space=vmem, size = 0x1000, scoped, tag = 'output window, operand 0, single buffered']
    %15 = vsyncpa [#allocation3], 0
    %16 = vsyncpa [#allocation6], 0
    %17 = vsyncpa [#allocation9], 0
    %18 = vsyncpa [#allocation12], 0
    %19 = vsyncpa [#allocation15], 0
    %20 = vsyncpa [#allocation4], 0
    // Predicated region
    $region2: #{mpn_forward.1} parent=1 // pred_check
      _
    $region3: #{mpn_forward.1} parent=1 // pred_check_branch
      %22 = sbr.rel (0) target = $region5
    $region4: #{mpn_forward.1} parent=1 // pred_region
      %s24 = ssub.s32 4096, 4096
      %25 = vsyncadd [#allocation3], %s24
      %s26 = sshll.u32 [#allocation2], 4
      %s27 = int_to_ptr.vmem [resolvable:$true] %s26
      %32 = dma.hbm_to_vmem [thread:$0]  %s0, 4096, %s27, [#allocation3], 128, 128, 8
    $region5: #{mpn_forward.1} parent=1 // pred_fallthru
      _
    // Predicated region
    $region6: #{mpn_forward.1} parent=1 // pred_check
      _
    $region7: #{mpn_forward.1} parent=1 // pred_check_branch
      %34 = sbr.rel (0) target = $region9
    $region8: #{mpn_forward.1} parent=1 // pred_region
      %s36 = ssub.s32 4096, 4096
      %37 = vsyncadd [#allocation6], %s36
      %s38 = sshll.u32 [#allocation5], 4
      %s39 = int_to_ptr.vmem [resolvable:$true] %s38
      %44 = dma.hbm_to_vmem [thread:$0]  %s1, 4096, %s39, [#allocation6], 128, 128, 8
    $region9: #{mpn_forward.1} parent=1 // pred_fallthru
      _
    // Predicated region
    $region10: #{mpn_forward.1} parent=1 // pred_check
      _
    $region11: #{mpn_forward.1} parent=1 // pred_check_branch
      %46 = sbr.rel (0) target = $region13
    $region12: #{mpn_forward.1} parent=1 // pred_region
      %s48 = ssub.s32 8192, 8192
      %49 = vsyncadd [#allocation6], %s48
      %s50 = sshll.u32 [#allocation7], 4
      %s51 = int_to_ptr.vmem [resolvable:$true] %s50
      %56 = dma.hbm_to_vmem [thread:$0]  %s2, 8192, %s51, [#allocation6], 256, 256, 16
    $region13: #{mpn_forward.1} parent=1 // pred_fallthru
      _
    // Predicated region
    $region14: #{mpn_forward.1} parent=1 // pred_check
      _
    $region15: #{mpn_forward.1} parent=1 // pred_check_branch
      %58 = sbr.rel (0) target = $region17
    $region16: #{mpn_forward.1} parent=1 // pred_region
      %s60 = ssub.s32 8192, 8192
      %61 = vsyncadd [#allocation9], %s60
      %s62 = sshll.u32 [#allocation8], 4
      %s63 = int_to_ptr.vmem [resolvable:$true] %s62
      %68 = dma.hbm_to_vmem [thread:$0]  %s3, 8192, %s63, [#allocation9], 256, 256, 16
    $region17: #{mpn_forward.1} parent=1 // pred_fallthru
      _
    // Predicated region
    $region18: #{mpn_forward.1} parent=1 // pred_check
      _
    $region19: #{mpn_forward.1} parent=1 // pred_check_branch
      %70 = sbr.rel (0) target = $region21
    $region20: #{mpn_forward.1} parent=1 // pred_region
      %s72 = ssub.s32 256, 256
      %73 = vsyncadd [#allocation9], %s72
      %s75 = sshll.u32 [#allocation10], 4
      %s76 = int_to_ptr.vmem [resolvable:$true] %s75
      %78 = dma.hbm_to_vmem [thread:$0]  %s4, 256, %s76, [#allocation9]
    $region21: #{mpn_forward.1} parent=1 // pred_fallthru
      _
    // Predicated region
    $region22: #{mpn_forward.1} parent=1 // pred_check
      _
    $region23: #{mpn_forward.1} parent=1 // pred_check_branch
      %80 = sbr.rel (0) target = $region25
    $region24: #{mpn_forward.1} parent=1 // pred_region
      %s82 = ssub.s32 2048, 2048
      %83 = vsyncadd [#allocation12], %s82
      %s84 = sshll.u32 [#allocation11], 4
      %s85 = int_to_ptr.vmem [resolvable:$true] %s84
      %90 = dma.hbm_to_vmem [thread:$0]  %s5, 2048, %s85, [#allocation12], 128, 128, 8
    $region25: #{mpn_forward.1} parent=1 // pred_fallthru
      _
    // Predicated region
    $region26: #{mpn_forward.1} parent=1 // pred_check
      _
    $region27: #{mpn_forward.1} parent=1 // pred_check_branch
      %92 = sbr.rel (0) target = $region29
    $region28: #{mpn_forward.1} parent=1 // pred_region
      %s94 = ssub.s32 2048, 2048
      %95 = vsyncadd [#allocation12], %s94
      %s96 = sshll.u32 [#allocation13], 4
      %s97 = int_to_ptr.vmem [resolvable:$true] %s96
      %102 = dma.hbm_to_vmem [thread:$0]  %s6, 2048, %s97, [#allocation12], 128, 128, 8
    $region29: #{mpn_forward.1} parent=1 // pred_fallthru
      _
    // Predicated region
    $region30: #{mpn_forward.1} parent=1 // pred_check
      _
    $region31: #{mpn_forward.1} parent=1 // pred_check_branch
      %104 = sbr.rel (0) target = $region33
    $region32: #{mpn_forward.1} parent=1 // pred_region
      %s106 = ssub.s32 2048, 2048
      %107 = vsyncadd [#allocation15], %s106
      %s108 = sshll.u32 [#allocation14], 4
      %s109 = int_to_ptr.vmem [resolvable:$true] %s108
      %114 = dma.hbm_to_vmem [thread:$0]  %s7, 2048, %s109, [#allocation15], 128, 128, 8
    $region33: #{mpn_forward.1} parent=1 // pred_fallthru
      _
    // Predicated region
    $region34: #{mpn_forward.1} parent=1 // pred_check
      _
    $region35: #{mpn_forward.1} parent=1 // pred_check_branch
      %116 = sbr.rel (0) target = $region37
    $region36: #{mpn_forward.1} parent=1 // pred_region
      %s118 = ssub.s32 2048, 2048
      %119 = vsyncadd [#allocation15], %s118
      %s120 = sshll.u32 [#allocation16], 4
      %s121 = int_to_ptr.vmem [resolvable:$true] %s120
      %126 = dma.hbm_to_vmem [thread:$0]  %s8, 2048, %s121, [#allocation15], 128, 128, 8
    $region37: #{mpn_forward.1} parent=1 // pred_fallthru
      _
    // Predicated region
    $region38: #{mpn_forward.1} parent=1 // pred_check
      _
    $region39: #{mpn_forward.1} parent=1 // pred_check_branch
      %128 = sbr.rel (0) target = $region41
    $region40: #{mpn_forward.1} parent=1 // pred_region
      _
    $region41: #{mpn_forward.1} parent=1 // pred_fallthru
      _
    // Predicated region
    $region42: #{mpn_forward.1} parent=1 // pred_check
      _
    $region43: #{mpn_forward.1} parent=1 // pred_check_branch
      %130 = sbr.rel (0) target = $region45
    $region44: #{mpn_forward.1} parent=1 // pred_region
      %131 = dma.done [#allocation3], 4096
    $region45: #{mpn_forward.1} parent=1 // pred_fallthru
      _
    // Predicated region
    $region46: #{mpn_forward.1} parent=1 // pred_check
      _
    $region47: #{mpn_forward.1} parent=1 // pred_check_branch
      %133 = sbr.rel (0) target = $region49
    $region48: #{mpn_forward.1} parent=1 // pred_region
      %134 = dma.done [#allocation6], 4096
    $region49: #{mpn_forward.1} parent=1 // pred_fallthru
      _
    // Predicated region
    $region50: #{mpn_forward.1} parent=1 // pred_check
      _
    $region51: #{mpn_forward.1} parent=1 // pred_check_branch
      %136 = sbr.rel (0) target = $region53
    $region52: #{mpn_forward.1} parent=1 // pred_region
      %137 = dma.done [#allocation6], 8192
    $region53: #{mpn_forward.1} parent=1 // pred_fallthru
      _
    // Predicated region
    $region54: #{mpn_forward.1} parent=1 // pred_check
      _
    $region55: #{mpn_forward.1} parent=1 // pred_check_branch
      %139 = sbr.rel (0) target = $region57
    $region56: #{mpn_forward.1} parent=1 // pred_region
      %140 = dma.done [#allocation9], 8192
    $region57: #{mpn_forward.1} parent=1 // pred_fallthru
      _
    // Predicated region
    $region58: #{mpn_forward.1} parent=1 // pred_check
      _
    $region59: #{mpn_forward.1} parent=1 // pred_check_branch
      %142 = sbr.rel (0) target = $region61
    $region60: #{mpn_forward.1} parent=1 // pred_region
      %143 = dma.done [#allocation9], 256
    $region61: #{mpn_forward.1} parent=1 // pred_fallthru
      _
    // Predicated region
    $region62: #{mpn_forward.1} parent=1 // pred_check
      _
    $region63: #{mpn_forward.1} parent=1 // pred_check_branch
      %145 = sbr.rel (0) target = $region65
    $region64: #{mpn_forward.1} parent=1 // pred_region
      %146 = dma.done [#allocation12], 2048
    $region65: #{mpn_forward.1} parent=1 // pred_fallthru
      _
    // Predicated region
    $region66: #{mpn_forward.1} parent=1 // pred_check
      _
    $region67: #{mpn_forward.1} parent=1 // pred_check_branch
      %148 = sbr.rel (0) target = $region69
    $region68: #{mpn_forward.1} parent=1 // pred_region
      %149 = dma.done [#allocation12], 2048
    $region69: #{mpn_forward.1} parent=1 // pred_fallthru
      _
    // Predicated region
    $region70: #{mpn_forward.1} parent=1 // pred_check
      _
    $region71: #{mpn_forward.1} parent=1 // pred_check_branch
      %151 = sbr.rel (0) target = $region73
    $region72: #{mpn_forward.1} parent=1 // pred_region
      %152 = dma.done [#allocation15], 2048
    $region73: #{mpn_forward.1} parent=1 // pred_fallthru
      _
    // Predicated region
    $region74: #{mpn_forward.1} parent=1 // pred_check
      _
    $region75: #{mpn_forward.1} parent=1 // pred_check_branch
      %154 = sbr.rel (0) target = $region77
    $region76: #{mpn_forward.1} parent=1 // pred_region
      %155 = dma.done [#allocation15], 2048
    $region77: #{mpn_forward.1} parent=1 // pred_fallthru
      _
    %v156 = vld [vmem:[#allocation5] sm:$0xff]
    %v157 = vld [vmem:[#allocation5 + $0x8] sm:$0xff]
    %v158 = vld [vmem:[#allocation5 + $0x10] sm:$0xff]
    %v159 = vld [vmem:[#allocation5 + $0x18] sm:$0xff]
    %v160 = vld [vmem:[#allocation5 + $0x20] sm:$0xff]
    %v161 = vld [vmem:[#allocation5 + $0x28] sm:$0xff]
    %v162 = vld [vmem:[#allocation5 + $0x30] sm:$0xff]
    %v163 = vld [vmem:[#allocation5 + $0x38] sm:$0xff]
    %v164 = vld [vmem:[#allocation5 + $0x40] sm:$0xff]
    %v165 = vld [vmem:[#allocation5 + $0x48] sm:$0xff]
    %v166 = vld [vmem:[#allocation5 + $0x50] sm:$0xff]
    %v167 = vld [vmem:[#allocation5 + $0x58] sm:$0xff]
    %v168 = vld [vmem:[#allocation5 + $0x60] sm:$0xff]
    %v169 = vld [vmem:[#allocation5 + $0x68] sm:$0xff]
    %v170 = vld [vmem:[#allocation5 + $0x70] sm:$0xff]
    %v171 = vld [vmem:[#allocation5 + $0x78] sm:$0xff]
    %v172 = vld [vmem:[#allocation5 + $0x80] sm:$0xff]
    %v173 = vld [vmem:[#allocation5 + $0x88] sm:$0xff]
    %v174 = vld [vmem:[#allocation5 + $0x90] sm:$0xff]
    %v175 = vld [vmem:[#allocation5 + $0x98] sm:$0xff]
    %v176 = vld [vmem:[#allocation5 + $0xa0] sm:$0xff]
    %v177 = vld [vmem:[#allocation5 + $0xa8] sm:$0xff]
    %v178 = vld [vmem:[#allocation5 + $0xb0] sm:$0xff]
    %v179 = vld [vmem:[#allocation5 + $0xb8] sm:$0xff]
    %v180 = vld [vmem:[#allocation5 + $0xc0] sm:$0xff]
    %v181 = vld [vmem:[#allocation5 + $0xc8] sm:$0xff]
    %v182 = vld [vmem:[#allocation5 + $0xd0] sm:$0xff]
    %v183 = vld [vmem:[#allocation5 + $0xd8] sm:$0xff]
    %v184 = vld [vmem:[#allocation5 + $0xe0] sm:$0xff]
    %v185 = vld [vmem:[#allocation5 + $0xe8] sm:$0xff]
    %v186 = vld [vmem:[#allocation5 + $0xf0] sm:$0xff]
    %v187 = vld [vmem:[#allocation5 + $0xf8] sm:$0xff]
    %v188 = vld [vmem:[#allocation11] sm:$0xff]
    %v189 = vld [vmem:[#allocation11 + $0x8] sm:$0xff]
    %v190 = vld [vmem:[#allocation11 + $0x10] sm:$0xff]
    %v191 = vld [vmem:[#allocation11 + $0x18] sm:$0xff]
    %v192 = vld [vmem:[#allocation11 + $0x20] sm:$0xff]
    %v193 = vld [vmem:[#allocation11 + $0x28] sm:$0xff]
    %v194 = vld [vmem:[#allocation11 + $0x30] sm:$0xff]
    %v195 = vld [vmem:[#allocation11 + $0x38] sm:$0xff]
    %v196 = vld [vmem:[#allocation11 + $0x40] sm:$0xff]
    %v197 = vld [vmem:[#allocation11 + $0x48] sm:$0xff]
    %v198 = vld [vmem:[#allocation11 + $0x50] sm:$0xff]
    %v199 = vld [vmem:[#allocation11 + $0x58] sm:$0xff]
    %v200 = vld [vmem:[#allocation11 + $0x60] sm:$0xff]
    %v201 = vld [vmem:[#allocation11 + $0x68] sm:$0xff]
    %v202 = vld [vmem:[#allocation11 + $0x70] sm:$0xff]
    %v203 = vld [vmem:[#allocation11 + $0x78] sm:$0xff]
    %204 = vmatprep.subr.mxu0 0.0
    %205 = vmatpush1.msra.mxu0 %v188
    %206 = vmatprep.subr.mxu0 0.0
    %207 = vmatpush1.msra.mxu0 %v189
    %208 = vmatprep.subr.mxu0 0.0
    %209 = vmatpush1.msra.mxu0 %v190
    %210 = vmatprep.subr.mxu0 0.0
    %211 = vmatpush1.msra.mxu0 %v191
    %212 = vmatprep.subr.mxu0 0.0
    %213 = vmatpush1.msra.mxu0 %v192
    %214 = vmatprep.subr.mxu0 0.0
    %215 = vmatpush1.msra.mxu0 %v193
    %216 = vmatprep.subr.mxu0 0.0
    %217 = vmatpush1.msra.mxu0 %v194
    %218 = vmatprep.subr.mxu0 0.0
    %219 = vmatpush1.msra.mxu0 %v195
    %220 = vmatprep.subr.mxu0 0.0
    %221 = vmatpush1.msra.mxu0 %v196
    %222 = vmatprep.subr.mxu0 0.0
    %223 = vmatpush1.msra.mxu0 %v197
    %224 = vmatprep.subr.mxu0 0.0
    %225 = vmatpush1.msra.mxu0 %v198
    %226 = vmatprep.subr.mxu0 0.0
    %227 = vmatpush1.msra.mxu0 %v199
    %228 = vmatprep.subr.mxu0 0.0
    %229 = vmatpush1.msra.mxu0 %v200
    %230 = vmatprep.subr.mxu0 0.0
    %231 = vmatpush1.msra.mxu0 %v201
    %232 = vmatprep.subr.mxu0 0.0
    %233 = vmatpush1.msra.mxu0 %v202
    %234 = vmatprep.subr.mxu0 0.0
    %235 = vmatpush1.msra.mxu0 %v203
    %236 = vmatprep.subr.mxu0 0.0
    %237 = vmatpush1.msra.mxu0 0.0
    %238 = vmatprep.subr.mxu0 0.0
    %239 = vmatpush1.msra.mxu0 0.0
    %240 = vmatprep.subr.mxu0 0.0
    %241 = vmatpush1.msra.mxu0 0.0
    %242 = vmatprep.subr.mxu0 0.0
    %243 = vmatpush1.msra.mxu0 0.0
    %244 = vmatprep.subr.mxu0 0.0
    %245 = vmatpush1.msra.mxu0 0.0
    %246 = vmatprep.subr.mxu0 0.0
    %247 = vmatpush1.msra.mxu0 0.0
    %248 = vmatprep.subr.mxu0 0.0
    %249 = vmatpush1.msra.mxu0 0.0
    %250 = vmatprep.subr.mxu0 0.0
    %251 = vmatpush1.msra.mxu0 0.0
    %252 = vmatprep.subr.mxu0 0.0
    %253 = vmatpush1.msra.mxu0 0.0
    %254 = vmatprep.subr.mxu0 0.0
    %255 = vmatpush1.msra.mxu0 0.0
    %256 = vmatprep.subr.mxu0 0.0
    %257 = vmatpush1.msra.mxu0 0.0
    %258 = vmatprep.subr.mxu0 0.0
    %259 = vmatpush1.msra.mxu0 0.0
    %260 = vmatprep.subr.mxu0 0.0
    %261 = vmatpush1.msra.mxu0 0.0
    %262 = vmatprep.subr.mxu0 0.0
    %263 = vmatpush1.msra.mxu0 0.0
    %264 = vmatprep.subr.mxu0 0.0
    %265 = vmatpush1.msra.mxu0 0.0
    %266 = vmatprep.subr.mxu0 0.0
    %267 = vmatpush1.msra.mxu0 0.0
    %268 = vmatprep.mubr.f32.mxu0 0.0
    %269 = vmatmul.mubr.f32.gmra.mrb[0].mxu0 %v156
    %v270 = vpop.f32.mrb[0].mxu0
    %v271 = vadd.f32 0.0, %v270
    %v272 = vpop.f32.mrb[0].mxu0
    %273 = vmatprep.mubr.f32.mxu0 0.0
    %274 = vmatmul.mubr.f32.gmra.mrb[0].mxu0 %v157
    %v275 = vpop.f32.mrb[0].mxu0
    %v276 = vadd.f32 0.0, %v275
    %v277 = vpop.f32.mrb[0].mxu0
    %278 = vmatprep.mubr.f32.mxu0 0.0
    %279 = vmatmul.mubr.f32.gmra.mrb[0].mxu0 %v158
    %v280 = vpop.f32.mrb[0].mxu0
    %v281 = vadd.f32 0.0, %v280
    %v282 = vpop.f32.mrb[0].mxu0
    %283 = vmatprep.mubr.f32.mxu0 0.0
    %284 = vmatmul.mubr.f32.gmra.mrb[0].mxu0 %v159
    %v285 = vpop.f32.mrb[0].mxu0
    %v286 = vadd.f32 0.0, %v285
    %v287 = vpop.f32.mrb[0].mxu0
    %288 = vmatprep.mubr.f32.mxu0 0.0
    %289 = vmatmul.mubr.f32.gmra.mrb[0].mxu0 %v160
    %v290 = vpop.f32.mrb[0].mxu0
    %v291 = vadd.f32 0.0, %v290
    %v292 = vpop.f32.mrb[0].mxu0
    %293 = vmatprep.mubr.f32.mxu0 0.0
    %294 = vmatmul.mubr.f32.gmra.mrb[0].mxu0 %v161
    %v295 = vpop.f32.mrb[0].mxu0
    %v296 = vadd.f32 0.0, %v295
    %v297 = vpop.f32.mrb[0].mxu0
    %298 = vmatprep.mubr.f32.mxu0 0.0
    %299 = vmatmul.mubr.f32.gmra.mrb[0].mxu0 %v162
    %v300 = vpop.f32.mrb[0].mxu0
    %v301 = vadd.f32 0.0, %v300
    %v302 = vpop.f32.mrb[0].mxu0
    %303 = vmatprep.mubr.f32.mxu0 0.0
    %304 = vmatmul.mubr.f32.gmra.mrb[0].mxu0 %v163
    %v305 = vpop.f32.mrb[0].mxu0
    %v306 = vadd.f32 0.0, %v305
    %v307 = vpop.f32.mrb[0].mxu0
    %308 = vmatprep.mubr.f32.mxu0 0.0
    %309 = vmatmul.mubr.f32.gmra.mrb[0].mxu0 %v164
    %v310 = vpop.f32.mrb[0].mxu0
    %v311 = vadd.f32 0.0, %v310
    %v312 = vpop.f32.mrb[0].mxu0
    %313 = vmatprep.mubr.f32.mxu0 0.0
    %314 = vmatmul.mubr.f32.gmra.mrb[0].mxu0 %v165
    %v315 = vpop.f32.mrb[0].mxu0
    %v316 = vadd.f32 0.0, %v315
    %v317 = vpop.f32.mrb[0].mxu0
    %318 = vmatprep.mubr.f32.mxu0 0.0
    %319 = vmatmul.mubr.f32.gmra.mrb[0].mxu0 %v166
    %v320 = vpop.f32.mrb[0].mxu0
    %v321 = vadd.f32 0.0, %v320
    %v322 = vpop.f32.mrb[0].mxu0
    %323 = vmatprep.mubr.f32.mxu0 0.0
    %324 = vmatmul.mubr.f32.gmra.mrb[0].mxu0 %v167
    %v325 = vpop.f32.mrb[0].mxu0
    %v326 = vadd.f32 0.0, %v325
    %v327 = vpop.f32.mrb[0].mxu0
    %328 = vmatprep.mubr.f32.mxu0 0.0
    %329 = vmatmul.mubr.f32.gmra.mrb[0].mxu0 %v168
    %v330 = vpop.f32.mrb[0].mxu0
    %v331 = vadd.f32 0.0, %v330
    %v332 = vpop.f32.mrb[0].mxu0
    %333 = vmatprep.mubr.f32.mxu0 0.0
    %334 = vmatmul.mubr.f32.gmra.mrb[0].mxu0 %v169
    %v335 = vpop.f32.mrb[0].mxu0
    %v336 = vadd.f32 0.0, %v335
    %v337 = vpop.f32.mrb[0].mxu0
    %338 = vmatprep.mubr.f32.mxu0 0.0
    %339 = vmatmul.mubr.f32.gmra.mrb[0].mxu0 %v170
    %v340 = vpop.f32.mrb[0].mxu0
    %v341 = vadd.f32 0.0, %v340
    %v342 = vpop.f32.mrb[0].mxu0
    %343 = vmatprep.mubr.f32.mxu0 0.0
    %344 = vmatmul.mubr.f32.gmra.mrb[0].mxu0 %v171
    %v345 = vpop.f32.mrb[0].mxu0
    %v346 = vadd.f32 0.0, %v345
    %v347 = vpop.f32.mrb[0].mxu0
    %348 = vmatprep.mubr.f32.mxu0 0.0
    %349 = vmatmul.mubr.f32.gmra.mrb[0].mxu0 %v172
    %v350 = vpop.f32.mrb[0].mxu0
    %v351 = vadd.f32 0.0, %v350
    %v352 = vpop.f32.mrb[0].mxu0
    %353 = vmatprep.mubr.f32.mxu0 0.0
    %354 = vmatmul.mubr.f32.gmra.mrb[0].mxu0 %v173
    %v355 = vpop.f32.mrb[0].mxu0
    %v356 = vadd.f32 0.0, %v355
    %v357 = vpop.f32.mrb[0].mxu0
    %358 = vmatprep.mubr.f32.mxu0 0.0
    %359 = vmatmul.mubr.f32.gmra.mrb[0].mxu0 %v174
    %v360 = vpop.f32.mrb[0].mxu0
    %v361 = vadd.f32 0.0, %v360
    %v362 = vpop.f32.mrb[0].mxu0
    %363 = vmatprep.mubr.f32.mxu0 0.0
    %364 = vmatmul.mubr.f32.gmra.mrb[0].mxu0 %v175
    %v365 = vpop.f32.mrb[0].mxu0
    %v366 = vadd.f32 0.0, %v365
    %v367 = vpop.f32.mrb[0].mxu0
    %368 = vmatprep.mubr.f32.mxu0 0.0
    %369 = vmatmul.mubr.f32.gmra.mrb[0].mxu0 %v176
    %v370 = vpop.f32.mrb[0].mxu0
    %v371 = vadd.f32 0.0, %v370
    %v372 = vpop.f32.mrb[0].mxu0
    %373 = vmatprep.mubr.f32.mxu0 0.0
    %374 = vmatmul.mubr.f32.gmra.mrb[0].mxu0 %v177
    %v375 = vpop.f32.mrb[0].mxu0
    %v376 = vadd.f32 0.0, %v375
    %v377 = vpop.f32.mrb[0].mxu0
    %378 = vmatprep.mubr.f32.mxu0 0.0
    %379 = vmatmul.mubr.f32.gmra.mrb[0].mxu0 %v178
    %v380 = vpop.f32.mrb[0].mxu0
    %v381 = vadd.f32 0.0, %v380
    %v382 = vpop.f32.mrb[0].mxu0
    %383 = vmatprep.mubr.f32.mxu0 0.0
    %384 = vmatmul.mubr.f32.gmra.mrb[0].mxu0 %v179
    %v385 = vpop.f32.mrb[0].mxu0
    %v386 = vadd.f32 0.0, %v385
    %v387 = vpop.f32.mrb[0].mxu0
    %388 = vmatprep.mubr.f32.mxu0 0.0
    %389 = vmatmul.mubr.f32.gmra.mrb[0].mxu0 %v180
    %v390 = vpop.f32.mrb[0].mxu0
    %v391 = vadd.f32 0.0, %v390
    %v392 = vpop.f32.mrb[0].mxu0
    %393 = vmatprep.mubr.f32.mxu0 0.0
    %394 = vmatmul.mubr.f32.gmra.mrb[0].mxu0 %v181
    %v395 = vpop.f32.mrb[0].mxu0
    %v396 = vadd.f32 0.0, %v395
    %v397 = vpop.f32.mrb[0].mxu0
    %398 = vmatprep.mubr.f32.mxu0 0.0
    %399 = vmatmul.mubr.f32.gmra.mrb[0].mxu0 %v182
    %v400 = vpop.f32.mrb[0].mxu0
    %v401 = vadd.f32 0.0, %v400
    %v402 = vpop.f32.mrb[0].mxu0
    %403 = vmatprep.mubr.f32.mxu0 0.0
    %404 = vmatmul.mubr.f32.gmra.mrb[0].mxu0 %v183
    %v405 = vpop.f32.mrb[0].mxu0
    %v406 = vadd.f32 0.0, %v405
    %v407 = vpop.f32.mrb[0].mxu0
    %408 = vmatprep.mubr.f32.mxu0 0.0
    %409 = vmatmul.mubr.f32.gmra.mrb[0].mxu0 %v184
    %v410 = vpop.f32.mrb[0].mxu0
    %v411 = vadd.f32 0.0, %v410
    %v412 = vpop.f32.mrb[0].mxu0
    %413 = vmatprep.mubr.f32.mxu0 0.0
    %414 = vmatmul.mubr.f32.gmra.mrb[0].mxu0 %v185
    %v415 = vpop.f32.mrb[0].mxu0
    %v416 = vadd.f32 0.0, %v415
    %v417 = vpop.f32.mrb[0].mxu0
    %418 = vmatprep.mubr.f32.mxu0 0.0
    %419 = vmatmul.mubr.f32.gmra.mrb[0].mxu0 %v186
    %v420 = vpop.f32.mrb[0].mxu0
    %v421 = vadd.f32 0.0, %v420
    %v422 = vpop.f32.mrb[0].mxu0
    %423 = vmatprep.mubr.f32.mxu0 0.0
    %424 = vmatmul.mubr.f32.gmra.mrb[0].mxu0 %v187
    %v425 = vpop.f32.mrb[0].mxu0
    %v426 = vadd.f32 0.0, %v425
    %v427 = vpop.f32.mrb[0].mxu0
    %428 = vdwg.mxu0
    %v429 = vmax.f32 %v271, 0.0
    %v430 = vmax.f32 %v276, 0.0
    %v431 = vmax.f32 %v281, 0.0
    %v432 = vmax.f32 %v286, 0.0
    %v433 = vmax.f32 %v291, 0.0
    %v434 = vmax.f32 %v296, 0.0
    %v435 = vmax.f32 %v301, 0.0
    %v436 = vmax.f32 %v306, 0.0
    %v437 = vmax.f32 %v311, 0.0
    %v438 = vmax.f32 %v316, 0.0
    %v439 = vmax.f32 %v321, 0.0
    %v440 = vmax.f32 %v326, 0.0
    %v441 = vmax.f32 %v331, 0.0
    %v442 = vmax.f32 %v336, 0.0
    %v443 = vmax.f32 %v341, 0.0
    %v444 = vmax.f32 %v346, 0.0
    %v445 = vmax.f32 %v351, 0.0
    %v446 = vmax.f32 %v356, 0.0
    %v447 = vmax.f32 %v361, 0.0
    %v448 = vmax.f32 %v366, 0.0
    %v449 = vmax.f32 %v371, 0.0
    %v450 = vmax.f32 %v376, 0.0
    %v451 = vmax.f32 %v381, 0.0
    %v452 = vmax.f32 %v386, 0.0
    %v453 = vmax.f32 %v391, 0.0
    %v454 = vmax.f32 %v396, 0.0
    %v455 = vmax.f32 %v401, 0.0
    %v456 = vmax.f32 %v406, 0.0
    %v457 = vmax.f32 %v411, 0.0
    %v458 = vmax.f32 %v416, 0.0
    %v459 = vmax.f32 %v421, 0.0
    %v460 = vmax.f32 %v426, 0.0
    %v461 = vld [vmem:[#allocation7] sm:$0xff]
    %v462 = vld [vmem:[#allocation7 + $0x8] sm:$0xff]
    %v463 = vld [vmem:[#allocation7 + $0x10] sm:$0xff]
    %v464 = vld [vmem:[#allocation7 + $0x18] sm:$0xff]
    %v465 = vld [vmem:[#allocation7 + $0x20] sm:$0xff]
    %v466 = vld [vmem:[#allocation7 + $0x28] sm:$0xff]
    %v467 = vld [vmem:[#allocation7 + $0x30] sm:$0xff]
    %v468 = vld [vmem:[#allocation7 + $0x38] sm:$0xff]
    %v469 = vld [vmem:[#allocation7 + $0x40] sm:$0xff]
    %v470 = vld [vmem:[#allocation7 + $0x48] sm:$0xff]
    %v471 = vld [vmem:[#allocation7 + $0x50] sm:$0xff]
    %v472 = vld [vmem:[#allocation7 + $0x58] sm:$0xff]
    %v473 = vld [vmem:[#allocation7 + $0x60] sm:$0xff]
    %v474 = vld [vmem:[#allocation7 + $0x68] sm:$0xff]
    %v475 = vld [vmem:[#allocation7 + $0x70] sm:$0xff]
    %v476 = vld [vmem:[#allocation7 + $0x78] sm:$0xff]
    %v477 = vld [vmem:[#allocation7 + $0x80] sm:$0xff]
    %v478 = vld [vmem:[#allocation7 + $0x88] sm:$0xff]
    %v479 = vld [vmem:[#allocation7 + $0x90] sm:$0xff]
    %v480 = vld [vmem:[#allocation7 + $0x98] sm:$0xff]
    %v481 = vld [vmem:[#allocation7 + $0xa0] sm:$0xff]
    %v482 = vld [vmem:[#allocation7 + $0xa8] sm:$0xff]
    %v483 = vld [vmem:[#allocation7 + $0xb0] sm:$0xff]
    %v484 = vld [vmem:[#allocation7 + $0xb8] sm:$0xff]
    %v485 = vld [vmem:[#allocation7 + $0xc0] sm:$0xff]
    %v486 = vld [vmem:[#allocation7 + $0xc8] sm:$0xff]
    %v487 = vld [vmem:[#allocation7 + $0xd0] sm:$0xff]
    %v488 = vld [vmem:[#allocation7 + $0xd8] sm:$0xff]
    %v489 = vld [vmem:[#allocation7 + $0xe0] sm:$0xff]
    %v490 = vld [vmem:[#allocation7 + $0xe8] sm:$0xff]
    %v491 = vld [vmem:[#allocation7 + $0xf0] sm:$0xff]
    %v492 = vld [vmem:[#allocation7 + $0xf8] sm:$0xff]
    %v493 = vld [vmem:[#allocation7 + $0x100] sm:$0xff]
    %v494 = vld [vmem:[#allocation7 + $0x108] sm:$0xff]
    %v495 = vld [vmem:[#allocation7 + $0x110] sm:$0xff]
    %v496 = vld [vmem:[#allocation7 + $0x118] sm:$0xff]
    %v497 = vld [vmem:[#allocation7 + $0x120] sm:$0xff]
    %v498 = vld [vmem:[#allocation7 + $0x128] sm:$0xff]
    %v499 = vld [vmem:[#allocation7 + $0x130] sm:$0xff]
    %v500 = vld [vmem:[#allocation7 + $0x138] sm:$0xff]
    %v501 = vld [vmem:[#allocation7 + $0x140] sm:$0xff]
    %v502 = vld [vmem:[#allocation7 + $0x148] sm:$0xff]
    %v503 = vld [vmem:[#allocation7 + $0x150] sm:$0xff]
    %v504 = vld [vmem:[#allocation7 + $0x158] sm:$0xff]
    %v505 = vld [vmem:[#allocation7 + $0x160] sm:$0xff]
    %v506 = vld [vmem:[#allocation7 + $0x168] sm:$0xff]
    %v507 = vld [vmem:[#allocation7 + $0x170] sm:$0xff]
    %v508 = vld [vmem:[#allocation7 + $0x178] sm:$0xff]
    %v509 = vld [vmem:[#allocation7 + $0x180] sm:$0xff]
    %v510 = vld [vmem:[#allocation7 + $0x188] sm:$0xff]
    %v511 = vld [vmem:[#allocation7 + $0x190] sm:$0xff]
    %v512 = vld [vmem:[#allocation7 + $0x198] sm:$0xff]
    %v513 = vld [vmem:[#allocation7 + $0x1a0] sm:$0xff]
    %v514 = vld [vmem:[#allocation7 + $0x1a8] sm:$0xff]
    %v515 = vld [vmem:[#allocation7 + $0x1b0] sm:$0xff]
    %v516 = vld [vmem:[#allocation7 + $0x1b8] sm:$0xff]
    %v517 = vld [vmem:[#allocation7 + $0x1c0] sm:$0xff]
    %v518 = vld [vmem:[#allocation7 + $0x1c8] sm:$0xff]
    %v519 = vld [vmem:[#allocation7 + $0x1d0] sm:$0xff]
    %v520 = vld [vmem:[#allocation7 + $0x1d8] sm:$0xff]
    %v521 = vld [vmem:[#allocation7 + $0x1e0] sm:$0xff]
    %v522 = vld [vmem:[#allocation7 + $0x1e8] sm:$0xff]
    %v523 = vld [vmem:[#allocation7 + $0x1f0] sm:$0xff]
    %v524 = vld [vmem:[#allocation7 + $0x1f8] sm:$0xff]
    %v525 = vld [vmem:[#allocation13] sm:$0xff]
    %v526 = vld [vmem:[#allocation13 + $0x8] sm:$0xff]
    %v527 = vld [vmem:[#allocation13 + $0x10] sm:$0xff]
    %v528 = vld [vmem:[#allocation13 + $0x18] sm:$0xff]
    %v529 = vld [vmem:[#allocation13 + $0x20] sm:$0xff]
    %v530 = vld [vmem:[#allocation13 + $0x28] sm:$0xff]
    %v531 = vld [vmem:[#allocation13 + $0x30] sm:$0xff]
    %v532 = vld [vmem:[#allocation13 + $0x38] sm:$0xff]
    %v533 = vld [vmem:[#allocation13 + $0x40] sm:$0xff]
    %v534 = vld [vmem:[#allocation13 + $0x48] sm:$0xff]
    %v535 = vld [vmem:[#allocation13 + $0x50] sm:$0xff]
    %v536 = vld [vmem:[#allocation13 + $0x58] sm:$0xff]
    %v537 = vld [vmem:[#allocation13 + $0x60] sm:$0xff]
    %v538 = vld [vmem:[#allocation13 + $0x68] sm:$0xff]
    %v539 = vld [vmem:[#allocation13 + $0x70] sm:$0xff]
    %v540 = vld [vmem:[#allocation13 + $0x78] sm:$0xff]
    %541 = vmatprep.subr.mxu0 0.0
    %542 = vmatpush1.msra.mxu0 %v429
    %543 = vmatprep.subr.mxu0 0.0
    %544 = vmatpush1.msra.mxu0 %v430
    %545 = vmatprep.subr.mxu0 0.0
    %546 = vmatpush1.msra.mxu0 %v431
    %547 = vmatprep.subr.mxu0 0.0
    %548 = vmatpush1.msra.mxu0 %v432
    %549 = vmatprep.subr.mxu0 0.0
    %550 = vmatpush1.msra.mxu0 %v433
    %551 = vmatprep.subr.mxu0 0.0
    %552 = vmatpush1.msra.mxu0 %v434
    %553 = vmatprep.subr.mxu0 0.0
    %554 = vmatpush1.msra.mxu0 %v435
    %555 = vmatprep.subr.mxu0 0.0
    %556 = vmatpush1.msra.mxu0 %v436
    %557 = vmatprep.subr.mxu0 0.0
    %558 = vmatpush1.msra.mxu0 %v437
    %559 = vmatprep.subr.mxu0 0.0
    %560 = vmatpush1.msra.mxu0 %v438
    %561 = vmatprep.subr.mxu0 0.0
    %562 = vmatpush1.msra.mxu0 %v439
    %563 = vmatprep.subr.mxu0 0.0
    %564 = vmatpush1.msra.mxu0 %v440
    %565 = vmatprep.subr.mxu0 0.0
    %566 = vmatpush1.msra.mxu0 %v441
    %567 = vmatprep.subr.mxu0 0.0
    %568 = vmatpush1.msra.mxu0 %v442
    %569 = vmatprep.subr.mxu0 0.0
    %570 = vmatpush1.msra.mxu0 %v443
    %571 = vmatprep.subr.mxu0 0.0
    %572 = vmatpush1.msra.mxu0 %v444
    %573 = vmatprep.subr.mxu0 0.0
    %574 = vmatpush1.msra.mxu0 %v445
    %575 = vmatprep.subr.mxu0 0.0
    %576 = vmatpush1.msra.mxu0 %v446
    %577 = vmatprep.subr.mxu0 0.0
    %578 = vmatpush1.msra.mxu0 %v447
    %579 = vmatprep.subr.mxu0 0.0
    %580 = vmatpush1.msra.mxu0 %v448
    %581 = vmatprep.subr.mxu0 0.0
    %582 = vmatpush1.msra.mxu0 %v449
    %583 = vmatprep.subr.mxu0 0.0
    %584 = vmatpush1.msra.mxu0 %v450
    %585 = vmatprep.subr.mxu0 0.0
    %586 = vmatpush1.msra.mxu0 %v451
    %587 = vmatprep.subr.mxu0 0.0
    %588 = vmatpush1.msra.mxu0 %v452
    %589 = vmatprep.subr.mxu0 0.0
    %590 = vmatpush1.msra.mxu0 %v453
    %591 = vmatprep.subr.mxu0 0.0
    %592 = vmatpush1.msra.mxu0 %v454
    %593 = vmatprep.subr.mxu0 0.0
    %594 = vmatpush1.msra.mxu0 %v455
    %595 = vmatprep.subr.mxu0 0.0
    %596 = vmatpush1.msra.mxu0 %v456
    %597 = vmatprep.subr.mxu0 0.0
    %598 = vmatpush1.msra.mxu0 %v457
    %599 = vmatprep.subr.mxu0 0.0
    %600 = vmatpush1.msra.mxu0 %v458
    %601 = vmatprep.subr.mxu0 0.0
    %602 = vmatpush1.msra.mxu0 %v459
    %603 = vmatprep.subr.mxu0 0.0
    %604 = vmatpush1.msra.mxu0 %v460
    %605 = vmatprep.mubr.f32.mxu0 %v462
    %606 = vmatmul.mubr.f32.gmra.mrb[0].mxu0 %v461
    %v607 = vpop.f32.mrb[0].mxu0
    %v608 = vadd.f32 0.0, %v607
    %v609 = vpop.f32.mrb[0].mxu0
    %610 = vmatprep.mubr.f32.mxu0 %v464
    %611 = vmatmul.mubr.f32.gmra.mrb[0].mxu0 %v463
    %v612 = vpop.f32.mrb[0].mxu0
    %v613 = vadd.f32 0.0, %v612
    %v614 = vpop.f32.mrb[0].mxu0
    %615 = vmatprep.mubr.f32.mxu0 %v466
    %616 = vmatmul.mubr.f32.gmra.mrb[0].mxu0 %v465
    %v617 = vpop.f32.mrb[0].mxu0
    %v618 = vadd.f32 0.0, %v617
    %v619 = vpop.f32.mrb[0].mxu0
    %620 = vmatprep.mubr.f32.mxu0 %v468
    %621 = vmatmul.mubr.f32.gmra.mrb[0].mxu0 %v467
    %v622 = vpop.f32.mrb[0].mxu0
    %v623 = vadd.f32 0.0, %v622
    %v624 = vpop.f32.mrb[0].mxu0
    %625 = vmatprep.mubr.f32.mxu0 %v470
    %626 = vmatmul.mubr.f32.gmra.mrb[0].mxu0 %v469
    %v627 = vpop.f32.mrb[0].mxu0
    %v628 = vadd.f32 0.0, %v627
    %v629 = vpop.f32.mrb[0].mxu0
    %630 = vmatprep.mubr.f32.mxu0 %v472
    %631 = vmatmul.mubr.f32.gmra.mrb[0].mxu0 %v471
    %v632 = vpop.f32.mrb[0].mxu0
    %v633 = vadd.f32 0.0, %v632
    %v634 = vpop.f32.mrb[0].mxu0
    %635 = vmatprep.mubr.f32.mxu0 %v474
    %636 = vmatmul.mubr.f32.gmra.mrb[0].mxu0 %v473
    %v637 = vpop.f32.mrb[0].mxu0
    %v638 = vadd.f32 0.0, %v637
    %v639 = vpop.f32.mrb[0].mxu0
    %640 = vmatprep.mubr.f32.mxu0 %v476
    %641 = vmatmul.mubr.f32.gmra.mrb[0].mxu0 %v475
    %v642 = vpop.f32.mrb[0].mxu0
    %v643 = vadd.f32 0.0, %v642
    %v644 = vpop.f32.mrb[0].mxu0
    %645 = vmatprep.mubr.f32.mxu0 %v478
    %646 = vmatmul.mubr.f32.gmra.mrb[0].mxu0 %v477
    %v647 = vpop.f32.mrb[0].mxu0
    %v648 = vadd.f32 0.0, %v647
    %v649 = vpop.f32.mrb[0].mxu0
    %650 = vmatprep.mubr.f32.mxu0 %v480
    %651 = vmatmul.mubr.f32.gmra.mrb[0].mxu0 %v479
    %v652 = vpop.f32.mrb[0].mxu0
    %v653 = vadd.f32 0.0, %v652
    %v654 = vpop.f32.mrb[0].mxu0
    %655 = vmatprep.mubr.f32.mxu0 %v482
    %656 = vmatmul.mubr.f32.gmra.mrb[0].mxu0 %v481
    %v657 = vpop.f32.mrb[0].mxu0
    %v658 = vadd.f32 0.0, %v657
    %v659 = vpop.f32.mrb[0].mxu0
    %660 = vmatprep.mubr.f32.mxu0 %v484
    %661 = vmatmul.mubr.f32.gmra.mrb[0].mxu0 %v483
    %v662 = vpop.f32.mrb[0].mxu0
    %v663 = vadd.f32 0.0, %v662
    %v664 = vpop.f32.mrb[0].mxu0
    %665 = vmatprep.mubr.f32.mxu0 %v486
    %666 = vmatmul.mubr.f32.gmra.mrb[0].mxu0 %v485
    %v667 = vpop.f32.mrb[0].mxu0
    %v668 = vadd.f32 0.0, %v667
    %v669 = vpop.f32.mrb[0].mxu0
    %670 = vmatprep.mubr.f32.mxu0 %v488
    %671 = vmatmul.mubr.f32.gmra.mrb[0].mxu0 %v487
    %v672 = vpop.f32.mrb[0].mxu0
    %v673 = vadd.f32 0.0, %v672
    %v674 = vpop.f32.mrb[0].mxu0
    %675 = vmatprep.mubr.f32.mxu0 %v490
    %676 = vmatmul.mubr.f32.gmra.mrb[0].mxu0 %v489
    %v677 = vpop.f32.mrb[0].mxu0
    %v678 = vadd.f32 0.0, %v677
    %v679 = vpop.f32.mrb[0].mxu0
    %680 = vmatprep.mubr.f32.mxu0 %v492
    %681 = vmatmul.mubr.f32.gmra.mrb[0].mxu0 %v491
    %v682 = vpop.f32.mrb[0].mxu0
    %v683 = vadd.f32 0.0, %v682
    %v684 = vpop.f32.mrb[0].mxu0
    %685 = vmatprep.mubr.f32.mxu0 %v494
    %686 = vmatmul.mubr.f32.gmra.mrb[0].mxu0 %v493
    %v687 = vpop.f32.mrb[0].mxu0
    %v688 = vadd.f32 0.0, %v687
    %v689 = vpop.f32.mrb[0].mxu0
    %690 = vmatprep.mubr.f32.mxu0 %v496
    %691 = vmatmul.mubr.f32.gmra.mrb[0].mxu0 %v495
    %v692 = vpop.f32.mrb[0].mxu0
    %v693 = vadd.f32 0.0, %v692
    %v694 = vpop.f32.mrb[0].mxu0
    %695 = vmatprep.mubr.f32.mxu0 %v498
    %696 = vmatmul.mubr.f32.gmra.mrb[0].mxu0 %v497
    %v697 = vpop.f32.mrb[0].mxu0
    %v698 = vadd.f32 0.0, %v697
    %v699 = vpop.f32.mrb[0].mxu0
    %700 = vmatprep.mubr.f32.mxu0 %v500
    %701 = vmatmul.mubr.f32.gmra.mrb[0].mxu0 %v499
    %v702 = vpop.f32.mrb[0].mxu0
    %v703 = vadd.f32 0.0, %v702
    %v704 = vpop.f32.mrb[0].mxu0
    %705 = vmatprep.mubr.f32.mxu0 %v502
    %706 = vmatmul.mubr.f32.gmra.mrb[0].mxu0 %v501
    %v707 = vpop.f32.mrb[0].mxu0
    %v708 = vadd.f32 0.0, %v707
    %v709 = vpop.f32.mrb[0].mxu0
    %710 = vmatprep.mubr.f32.mxu0 %v504
    %711 = vmatmul.mubr.f32.gmra.mrb[0].mxu0 %v503
    %v712 = vpop.f32.mrb[0].mxu0
    %v713 = vadd.f32 0.0, %v712
    %v714 = vpop.f32.mrb[0].mxu0
    %715 = vmatprep.mubr.f32.mxu0 %v506
    %716 = vmatmul.mubr.f32.gmra.mrb[0].mxu0 %v505
    %v717 = vpop.f32.mrb[0].mxu0
    %v718 = vadd.f32 0.0, %v717
    %v719 = vpop.f32.mrb[0].mxu0
    %720 = vmatprep.mubr.f32.mxu0 %v508
    %721 = vmatmul.mubr.f32.gmra.mrb[0].mxu0 %v507
    %v722 = vpop.f32.mrb[0].mxu0
    %v723 = vadd.f32 0.0, %v722
    %v724 = vpop.f32.mrb[0].mxu0
    %725 = vmatprep.mubr.f32.mxu0 %v510
    %726 = vmatmul.mubr.f32.gmra.mrb[0].mxu0 %v509
    %v727 = vpop.f32.mrb[0].mxu0
    %v728 = vadd.f32 0.0, %v727
    %v729 = vpop.f32.mrb[0].mxu0
    %730 = vmatprep.mubr.f32.mxu0 %v512
    %731 = vmatmul.mubr.f32.gmra.mrb[0].mxu0 %v511
    %v732 = vpop.f32.mrb[0].mxu0
    %v733 = vadd.f32 0.0, %v732
    %v734 = vpop.f32.mrb[0].mxu0
    %735 = vmatprep.mubr.f32.mxu0 %v514
    %736 = vmatmul.mubr.f32.gmra.mrb[0].mxu0 %v513
    %v737 = vpop.f32.mrb[0].mxu0
    %v738 = vadd.f32 0.0, %v737
    %v739 = vpop.f32.mrb[0].mxu0
    %740 = vmatprep.mubr.f32.mxu0 %v516
    %741 = vmatmul.mubr.f32.gmra.mrb[0].mxu0 %v515
    %v742 = vpop.f32.mrb[0].mxu0
    %v743 = vadd.f32 0.0, %v742
    %v744 = vpop.f32.mrb[0].mxu0
    %745 = vmatprep.mubr.f32.mxu0 %v518
    %746 = vmatmul.mubr.f32.gmra.mrb[0].mxu0 %v517
    %v747 = vpop.f32.mrb[0].mxu0
    %v748 = vadd.f32 0.0, %v747
    %v749 = vpop.f32.mrb[0].mxu0
    %750 = vmatprep.mubr.f32.mxu0 %v520
    %751 = vmatmul.mubr.f32.gmra.mrb[0].mxu0 %v519
    %v752 = vpop.f32.mrb[0].mxu0
    %v753 = vadd.f32 0.0, %v752
    %v754 = vpop.f32.mrb[0].mxu0
    %755 = vmatprep.mubr.f32.mxu0 %v522
    %756 = vmatmul.mubr.f32.gmra.mrb[0].mxu0 %v521
    %v757 = vpop.f32.mrb[0].mxu0
    %v758 = vadd.f32 0.0, %v757
    %v759 = vpop.f32.mrb[0].mxu0
    %760 = vmatprep.mubr.f32.mxu0 %v524
    %761 = vmatmul.mubr.f32.gmra.mrb[0].mxu0 %v523
    %v762 = vpop.f32.mrb[0].mxu0
    %v763 = vadd.f32 0.0, %v762
    %v764 = vpop.f32.mrb[0].mxu0
    %765 = vdwg.mxu0
    %766 = vmatprep.subr.mxu0 0.0
    %767 = vmatpush1.msra.mxu0 %v525
    %768 = vmatprep.subr.mxu0 0.0
    %769 = vmatpush1.msra.mxu0 %v526
    %770 = vmatprep.subr.mxu0 0.0
    %771 = vmatpush1.msra.mxu0 %v527
    %772 = vmatprep.subr.mxu0 0.0
    %773 = vmatpush1.msra.mxu0 %v528
    %774 = vmatprep.subr.mxu0 0.0
    %775 = vmatpush1.msra.mxu0 %v529
    %776 = vmatprep.subr.mxu0 0.0
    %777 = vmatpush1.msra.mxu0 %v530
    %778 = vmatprep.subr.mxu0 0.0
    %779 = vmatpush1.msra.mxu0 %v531
    %780 = vmatprep.subr.mxu0 0.0
    %781 = vmatpush1.msra.mxu0 %v532
    %782 = vmatprep.subr.mxu0 0.0
    %783 = vmatpush1.msra.mxu0 %v533
    %784 = vmatprep.subr.mxu0 0.0
    %785 = vmatpush1.msra.mxu0 %v534
    %786 = vmatprep.subr.mxu0 0.0
    %787 = vmatpush1.msra.mxu0 %v535
    %788 = vmatprep.subr.mxu0 0.0
    %789 = vmatpush1.msra.mxu0 %v536
    %790 = vmatprep.subr.mxu0 0.0
    %791 = vmatpush1.msra.mxu0 %v537
    %792 = vmatprep.subr.mxu0 0.0
    %793 = vmatpush1.msra.mxu0 %v538
    %794 = vmatprep.subr.mxu0 0.0
    %795 = vmatpush1.msra.mxu0 %v539
    %796 = vmatprep.subr.mxu0 0.0
    %797 = vmatpush1.msra.mxu0 %v540
    %798 = vmatprep.subr.mxu0 0.0
    %799 = vmatpush1.msra.mxu0 0.0
    %800 = vmatprep.subr.mxu0 0.0
    %801 = vmatpush1.msra.mxu0 0.0
    %802 = vmatprep.subr.mxu0 0.0
    %803 = vmatpush1.msra.mxu0 0.0
    %804 = vmatprep.subr.mxu0 0.0
    %805 = vmatpush1.msra.mxu0 0.0
    %806 = vmatprep.subr.mxu0 0.0
    %807 = vmatpush1.msra.mxu0 0.0
    %808 = vmatprep.subr.mxu0 0.0
    %809 = vmatpush1.msra.mxu0 0.0
    %810 = vmatprep.subr.mxu0 0.0
    %811 = vmatpush1.msra.mxu0 0.0
    %812 = vmatprep.subr.mxu0 0.0
    %813 = vmatpush1.msra.mxu0 0.0
    %814 = vmatprep.subr.mxu0 0.0
    %815 = vmatpush1.msra.mxu0 0.0
    %816 = vmatprep.subr.mxu0 0.0
    %817 = vmatpush1.msra.mxu0 0.0
    %818 = vmatprep.subr.mxu0 0.0
    %819 = vmatpush1.msra.mxu0 0.0
    %820 = vmatprep.subr.mxu0 0.0
    %821 = vmatpush1.msra.mxu0 0.0
    %822 = vmatprep.subr.mxu0 0.0
    %823 = vmatpush1.msra.mxu0 0.0
    %824 = vmatprep.subr.mxu0 0.0
    %825 = vmatpush1.msra.mxu0 0.0
    %826 = vmatprep.subr.mxu0 0.0
    %827 = vmatpush1.msra.mxu0 0.0
    %828 = vmatprep.subr.mxu0 0.0
    %829 = vmatpush1.msra.mxu0 0.0
    %830 = vmatprep.mubr.f32.mxu0 0.0
    %831 = vmatmul.mubr.f32.gmra.mrb[0].mxu0 %v608
    %v832 = vpop.f32.mrb[0].mxu0
    %v833 = vadd.f32 0.0, %v832
    %v834 = vpop.f32.mrb[0].mxu0
    %835 = vmatprep.mubr.f32.mxu0 0.0
    %836 = vmatmul.mubr.f32.gmra.mrb[0].mxu0 %v613
    %v837 = vpop.f32.mrb[0].mxu0
    %v838 = vadd.f32 0.0, %v837
    %v839 = vpop.f32.mrb[0].mxu0
    %840 = vmatprep.mubr.f32.mxu0 0.0
    %841 = vmatmul.mubr.f32.gmra.mrb[0].mxu0 %v618
    %v842 = vpop.f32.mrb[0].mxu0
    %v843 = vadd.f32 0.0, %v842
    %v844 = vpop.f32.mrb[0].mxu0
    %845 = vmatprep.mubr.f32.mxu0 0.0
    %846 = vmatmul.mubr.f32.gmra.mrb[0].mxu0 %v623
    %v847 = vpop.f32.mrb[0].mxu0
    %v848 = vadd.f32 0.0, %v847
    %v849 = vpop.f32.mrb[0].mxu0
    %850 = vmatprep.mubr.f32.mxu0 0.0
    %851 = vmatmul.mubr.f32.gmra.mrb[0].mxu0 %v628
    %v852 = vpop.f32.mrb[0].mxu0
    %v853 = vadd.f32 0.0, %v852
    %v854 = vpop.f32.mrb[0].mxu0
    %855 = vmatprep.mubr.f32.mxu0 0.0
    %856 = vmatmul.mubr.f32.gmra.mrb[0].mxu0 %v633
    %v857 = vpop.f32.mrb[0].mxu0
    %v858 = vadd.f32 0.0, %v857
    %v859 = vpop.f32.mrb[0].mxu0
    %860 = vmatprep.mubr.f32.mxu0 0.0
    %861 = vmatmul.mubr.f32.gmra.mrb[0].mxu0 %v638
    %v862 = vpop.f32.mrb[0].mxu0
    %v863 = vadd.f32 0.0, %v862
    %v864 = vpop.f32.mrb[0].mxu0
    %865 = vmatprep.mubr.f32.mxu0 0.0
    %866 = vmatmul.mubr.f32.gmra.mrb[0].mxu0 %v643
    %v867 = vpop.f32.mrb[0].mxu0
    %v868 = vadd.f32 0.0, %v867
    %v869 = vpop.f32.mrb[0].mxu0
    %870 = vmatprep.mubr.f32.mxu0 0.0
    %871 = vmatmul.mubr.f32.gmra.mrb[0].mxu0 %v648
    %v872 = vpop.f32.mrb[0].mxu0
    %v873 = vadd.f32 0.0, %v872
    %v874 = vpop.f32.mrb[0].mxu0
    %875 = vmatprep.mubr.f32.mxu0 0.0
    %876 = vmatmul.mubr.f32.gmra.mrb[0].mxu0 %v653
    %v877 = vpop.f32.mrb[0].mxu0
    %v878 = vadd.f32 0.0, %v877
    %v879 = vpop.f32.mrb[0].mxu0
    %880 = vmatprep.mubr.f32.mxu0 0.0
    %881 = vmatmul.mubr.f32.gmra.mrb[0].mxu0 %v658
    %v882 = vpop.f32.mrb[0].mxu0
    %v883 = vadd.f32 0.0, %v882
    %v884 = vpop.f32.mrb[0].mxu0
    %885 = vmatprep.mubr.f32.mxu0 0.0
    %886 = vmatmul.mubr.f32.gmra.mrb[0].mxu0 %v663
    %v887 = vpop.f32.mrb[0].mxu0
    %v888 = vadd.f32 0.0, %v887
    %v889 = vpop.f32.mrb[0].mxu0
    %890 = vmatprep.mubr.f32.mxu0 0.0
    %891 = vmatmul.mubr.f32.gmra.mrb[0].mxu0 %v668
    %v892 = vpop.f32.mrb[0].mxu0
    %v893 = vadd.f32 0.0, %v892
    %v894 = vpop.f32.mrb[0].mxu0
    %895 = vmatprep.mubr.f32.mxu0 0.0
    %896 = vmatmul.mubr.f32.gmra.mrb[0].mxu0 %v673
    %v897 = vpop.f32.mrb[0].mxu0
    %v898 = vadd.f32 0.0, %v897
    %v899 = vpop.f32.mrb[0].mxu0
    %900 = vmatprep.mubr.f32.mxu0 0.0
    %901 = vmatmul.mubr.f32.gmra.mrb[0].mxu0 %v678
    %v902 = vpop.f32.mrb[0].mxu0
    %v903 = vadd.f32 0.0, %v902
    %v904 = vpop.f32.mrb[0].mxu0
    %905 = vmatprep.mubr.f32.mxu0 0.0
    %906 = vmatmul.mubr.f32.gmra.mrb[0].mxu0 %v683
    %v907 = vpop.f32.mrb[0].mxu0
    %v908 = vadd.f32 0.0, %v907
    %v909 = vpop.f32.mrb[0].mxu0
    %910 = vmatprep.mubr.f32.mxu0 0.0
    %911 = vmatmul.mubr.f32.gmra.mrb[0].mxu0 %v688
    %v912 = vpop.f32.mrb[0].mxu0
    %v913 = vadd.f32 0.0, %v912
    %v914 = vpop.f32.mrb[0].mxu0
    %915 = vmatprep.mubr.f32.mxu0 0.0
    %916 = vmatmul.mubr.f32.gmra.mrb[0].mxu0 %v693
    %v917 = vpop.f32.mrb[0].mxu0
    %v918 = vadd.f32 0.0, %v917
    %v919 = vpop.f32.mrb[0].mxu0
    %920 = vmatprep.mubr.f32.mxu0 0.0
    %921 = vmatmul.mubr.f32.gmra.mrb[0].mxu0 %v698
    %v922 = vpop.f32.mrb[0].mxu0
    %v923 = vadd.f32 0.0, %v922
    %v924 = vpop.f32.mrb[0].mxu0
    %925 = vmatprep.mubr.f32.mxu0 0.0
    %926 = vmatmul.mubr.f32.gmra.mrb[0].mxu0 %v703
    %v927 = vpop.f32.mrb[0].mxu0
    %v928 = vadd.f32 0.0, %v927
    %v929 = vpop.f32.mrb[0].mxu0
    %930 = vmatprep.mubr.f32.mxu0 0.0
    %931 = vmatmul.mubr.f32.gmra.mrb[0].mxu0 %v708
    %v932 = vpop.f32.mrb[0].mxu0
    %v933 = vadd.f32 0.0, %v932
    %v934 = vpop.f32.mrb[0].mxu0
    %935 = vmatprep.mubr.f32.mxu0 0.0
    %936 = vmatmul.mubr.f32.gmra.mrb[0].mxu0 %v713
    %v937 = vpop.f32.mrb[0].mxu0
    %v938 = vadd.f32 0.0, %v937
    %v939 = vpop.f32.mrb[0].mxu0
    %940 = vmatprep.mubr.f32.mxu0 0.0
    %941 = vmatmul.mubr.f32.gmra.mrb[0].mxu0 %v718
    %v942 = vpop.f32.mrb[0].mxu0
    %v943 = vadd.f32 0.0, %v942
    %v944 = vpop.f32.mrb[0].mxu0
    %945 = vmatprep.mubr.f32.mxu0 0.0
    %946 = vmatmul.mubr.f32.gmra.mrb[0].mxu0 %v723
    %v947 = vpop.f32.mrb[0].mxu0
    %v948 = vadd.f32 0.0, %v947
    %v949 = vpop.f32.mrb[0].mxu0
    %950 = vmatprep.mubr.f32.mxu0 0.0
    %951 = vmatmul.mubr.f32.gmra.mrb[0].mxu0 %v728
    %v952 = vpop.f32.mrb[0].mxu0
    %v953 = vadd.f32 0.0, %v952
    %v954 = vpop.f32.mrb[0].mxu0
    %955 = vmatprep.mubr.f32.mxu0 0.0
    %956 = vmatmul.mubr.f32.gmra.mrb[0].mxu0 %v733
    %v957 = vpop.f32.mrb[0].mxu0
    %v958 = vadd.f32 0.0, %v957
    %v959 = vpop.f32.mrb[0].mxu0
    %960 = vmatprep.mubr.f32.mxu0 0.0
    %961 = vmatmul.mubr.f32.gmra.mrb[0].mxu0 %v738
    %v962 = vpop.f32.mrb[0].mxu0
    %v963 = vadd.f32 0.0, %v962
    %v964 = vpop.f32.mrb[0].mxu0
    %965 = vmatprep.mubr.f32.mxu0 0.0
    %966 = vmatmul.mubr.f32.gmra.mrb[0].mxu0 %v743
    %v967 = vpop.f32.mrb[0].mxu0
    %v968 = vadd.f32 0.0, %v967
    %v969 = vpop.f32.mrb[0].mxu0
    %970 = vmatprep.mubr.f32.mxu0 0.0
    %971 = vmatmul.mubr.f32.gmra.mrb[0].mxu0 %v748
    %v972 = vpop.f32.mrb[0].mxu0
    %v973 = vadd.f32 0.0, %v972
    %v974 = vpop.f32.mrb[0].mxu0
    %975 = vmatprep.mubr.f32.mxu0 0.0
    %976 = vmatmul.mubr.f32.gmra.mrb[0].mxu0 %v753
    %v977 = vpop.f32.mrb[0].mxu0
    %v978 = vadd.f32 0.0, %v977
    %v979 = vpop.f32.mrb[0].mxu0
    %980 = vmatprep.mubr.f32.mxu0 0.0
    %981 = vmatmul.mubr.f32.gmra.mrb[0].mxu0 %v758
    %v982 = vpop.f32.mrb[0].mxu0
    %v983 = vadd.f32 0.0, %v982
    %v984 = vpop.f32.mrb[0].mxu0
    %985 = vmatprep.mubr.f32.mxu0 0.0
    %986 = vmatmul.mubr.f32.gmra.mrb[0].mxu0 %v763
    %v987 = vpop.f32.mrb[0].mxu0
    %v988 = vadd.f32 0.0, %v987
    %v989 = vpop.f32.mrb[0].mxu0
    %990 = vdwg.mxu0
    %v991 = vadd.f32 %v271, %v833
    %v992 = vadd.f32 %v276, %v838
    %v993 = vadd.f32 %v281, %v843
    %v994 = vadd.f32 %v286, %v848
    %v995 = vadd.f32 %v291, %v853
    %v996 = vadd.f32 %v296, %v858
    %v997 = vadd.f32 %v301, %v863
    %v998 = vadd.f32 %v306, %v868
    %v999 = vadd.f32 %v311, %v873
    %v1000 = vadd.f32 %v316, %v878
    %v1001 = vadd.f32 %v321, %v883
    %v1002 = vadd.f32 %v326, %v888
    %v1003 = vadd.f32 %v331, %v893
    %v1004 = vadd.f32 %v336, %v898
    %v1005 = vadd.f32 %v341, %v903
    %v1006 = vadd.f32 %v346, %v908
    %v1007 = vadd.f32 %v351, %v913
    %v1008 = vadd.f32 %v356, %v918
    %v1009 = vadd.f32 %v361, %v923
    %v1010 = vadd.f32 %v366, %v928
    %v1011 = vadd.f32 %v371, %v933
    %v1012 = vadd.f32 %v376, %v938
    %v1013 = vadd.f32 %v381, %v943
    %v1014 = vadd.f32 %v386, %v948
    %v1015 = vadd.f32 %v391, %v953
    %v1016 = vadd.f32 %v396, %v958
    %v1017 = vadd.f32 %v401, %v963
    %v1018 = vadd.f32 %v406, %v968
    %v1019 = vadd.f32 %v411, %v973
    %v1020 = vadd.f32 %v416, %v978
    %v1021 = vadd.f32 %v421, %v983
    %v1022 = vadd.f32 %v426, %v988
    %v1023 = vmax.f32 %v991, 0.0
    %v1024 = vmax.f32 %v992, 0.0
    %v1025 = vmax.f32 %v993, 0.0
    %v1026 = vmax.f32 %v994, 0.0
    %v1027 = vmax.f32 %v995, 0.0
    %v1028 = vmax.f32 %v996, 0.0
    %v1029 = vmax.f32 %v997, 0.0
    %v1030 = vmax.f32 %v998, 0.0
    %v1031 = vmax.f32 %v999, 0.0
    %v1032 = vmax.f32 %v1000, 0.0
    %v1033 = vmax.f32 %v1001, 0.0
    %v1034 = vmax.f32 %v1002, 0.0
    %v1035 = vmax.f32 %v1003, 0.0
    %v1036 = vmax.f32 %v1004, 0.0
    %v1037 = vmax.f32 %v1005, 0.0
    %v1038 = vmax.f32 %v1006, 0.0
    %v1039 = vmax.f32 %v1007, 0.0
    %v1040 = vmax.f32 %v1008, 0.0
    %v1041 = vmax.f32 %v1009, 0.0
    %v1042 = vmax.f32 %v1010, 0.0
    %v1043 = vmax.f32 %v1011, 0.0
    %v1044 = vmax.f32 %v1012, 0.0
    %v1045 = vmax.f32 %v1013, 0.0
    %v1046 = vmax.f32 %v1014, 0.0
    %v1047 = vmax.f32 %v1015, 0.0
    %v1048 = vmax.f32 %v1016, 0.0
    %v1049 = vmax.f32 %v1017, 0.0
    %v1050 = vmax.f32 %v1018, 0.0
    %v1051 = vmax.f32 %v1019, 0.0
    %v1052 = vmax.f32 %v1020, 0.0
    %v1053 = vmax.f32 %v1021, 0.0
    %v1054 = vmax.f32 %v1022, 0.0
    %1055 = vmatprep.subr.mxu0 0.0
    %1056 = vmatpush1.msra.mxu0 %v1023
    %1057 = vmatprep.subr.mxu0 0.0
    %1058 = vmatpush1.msra.mxu0 %v1024
    %1059 = vmatprep.subr.mxu0 0.0
    %1060 = vmatpush1.msra.mxu0 %v1025
    %1061 = vmatprep.subr.mxu0 0.0
    %1062 = vmatpush1.msra.mxu0 %v1026
    %1063 = vmatprep.subr.mxu0 0.0
    %1064 = vmatpush1.msra.mxu0 %v1027
    %1065 = vmatprep.subr.mxu0 0.0
    %1066 = vmatpush1.msra.mxu0 %v1028
    %1067 = vmatprep.subr.mxu0 0.0
    %1068 = vmatpush1.msra.mxu0 %v1029
    %1069 = vmatprep.subr.mxu0 0.0
    %1070 = vmatpush1.msra.mxu0 %v1030
    %1071 = vmatprep.subr.mxu0 0.0
    %1072 = vmatpush1.msra.mxu0 %v1031
    %1073 = vmatprep.subr.mxu0 0.0
    %1074 = vmatpush1.msra.mxu0 %v1032
    %1075 = vmatprep.subr.mxu0 0.0
    %1076 = vmatpush1.msra.mxu0 %v1033
    %1077 = vmatprep.subr.mxu0 0.0
    %1078 = vmatpush1.msra.mxu0 %v1034
    %1079 = vmatprep.subr.mxu0 0.0
    %1080 = vmatpush1.msra.mxu0 %v1035
    %1081 = vmatprep.subr.mxu0 0.0
    %1082 = vmatpush1.msra.mxu0 %v1036
    %1083 = vmatprep.subr.mxu0 0.0
    %1084 = vmatpush1.msra.mxu0 %v1037
    %1085 = vmatprep.subr.mxu0 0.0
    %1086 = vmatpush1.msra.mxu0 %v1038
    %1087 = vmatprep.subr.mxu0 0.0
    %1088 = vmatpush1.msra.mxu0 %v1039
    %1089 = vmatprep.subr.mxu0 0.0
    %1090 = vmatpush1.msra.mxu0 %v1040
    %1091 = vmatprep.subr.mxu0 0.0
    %1092 = vmatpush1.msra.mxu0 %v1041
    %1093 = vmatprep.subr.mxu0 0.0
    %1094 = vmatpush1.msra.mxu0 %v1042
    %1095 = vmatprep.subr.mxu0 0.0
    %1096 = vmatpush1.msra.mxu0 %v1043
    %1097 = vmatprep.subr.mxu0 0.0
    %1098 = vmatpush1.msra.mxu0 %v1044
    %1099 = vmatprep.subr.mxu0 0.0
    %1100 = vmatpush1.msra.mxu0 %v1045
    %1101 = vmatprep.subr.mxu0 0.0
    %1102 = vmatpush1.msra.mxu0 %v1046
    %1103 = vmatprep.subr.mxu0 0.0
    %1104 = vmatpush1.msra.mxu0 %v1047
    %1105 = vmatprep.subr.mxu0 0.0
    %1106 = vmatpush1.msra.mxu0 %v1048
    %1107 = vmatprep.subr.mxu0 0.0
    %1108 = vmatpush1.msra.mxu0 %v1049
    %1109 = vmatprep.subr.mxu0 0.0
    %1110 = vmatpush1.msra.mxu0 %v1050
    %1111 = vmatprep.subr.mxu0 0.0
    %1112 = vmatpush1.msra.mxu0 %v1051
    %1113 = vmatprep.subr.mxu0 0.0
    %1114 = vmatpush1.msra.mxu0 %v1052
    %1115 = vmatprep.subr.mxu0 0.0
    %1116 = vmatpush1.msra.mxu0 %v1053
    %1117 = vmatprep.subr.mxu0 0.0
    %1118 = vmatpush1.msra.mxu0 %v1054
    %1119 = vmatprep.mubr.f32.mxu0 %v462
    %1120 = vmatmul.mubr.f32.gmra.mrb[0].mxu0 %v461
    %v1121 = vpop.f32.mrb[0].mxu0
    %v1122 = vadd.f32 0.0, %v1121
    %v1123 = vpop.f32.mrb[0].mxu0
    %1124 = vmatprep.mubr.f32.mxu0 %v464
    %1125 = vmatmul.mubr.f32.gmra.mrb[0].mxu0 %v463
    %v1126 = vpop.f32.mrb[0].mxu0
    %v1127 = vadd.f32 0.0, %v1126
    %v1128 = vpop.f32.mrb[0].mxu0
    %1129 = vmatprep.mubr.f32.mxu0 %v466
    %1130 = vmatmul.mubr.f32.gmra.mrb[0].mxu0 %v465
    %v1131 = vpop.f32.mrb[0].mxu0
    %v1132 = vadd.f32 0.0, %v1131
    %v1133 = vpop.f32.mrb[0].mxu0
    %1134 = vmatprep.mubr.f32.mxu0 %v468
    %1135 = vmatmul.mubr.f32.gmra.mrb[0].mxu0 %v467
    %v1136 = vpop.f32.mrb[0].mxu0
    %v1137 = vadd.f32 0.0, %v1136
    %v1138 = vpop.f32.mrb[0].mxu0
    %1139 = vmatprep.mubr.f32.mxu0 %v470
    %1140 = vmatmul.mubr.f32.gmra.mrb[0].mxu0 %v469
    %v1141 = vpop.f32.mrb[0].mxu0
    %v1142 = vadd.f32 0.0, %v1141
    %v1143 = vpop.f32.mrb[0].mxu0
    %1144 = vmatprep.mubr.f32.mxu0 %v472
    %1145 = vmatmul.mubr.f32.gmra.mrb[0].mxu0 %v471
    %v1146 = vpop.f32.mrb[0].mxu0
    %v1147 = vadd.f32 0.0, %v1146
    %v1148 = vpop.f32.mrb[0].mxu0
    %1149 = vmatprep.mubr.f32.mxu0 %v474
    %1150 = vmatmul.mubr.f32.gmra.mrb[0].mxu0 %v473
    %v1151 = vpop.f32.mrb[0].mxu0
    %v1152 = vadd.f32 0.0, %v1151
    %v1153 = vpop.f32.mrb[0].mxu0
    %1154 = vmatprep.mubr.f32.mxu0 %v476
    %1155 = vmatmul.mubr.f32.gmra.mrb[0].mxu0 %v475
    %v1156 = vpop.f32.mrb[0].mxu0
    %v1157 = vadd.f32 0.0, %v1156
    %v1158 = vpop.f32.mrb[0].mxu0
    %1159 = vmatprep.mubr.f32.mxu0 %v478
    %1160 = vmatmul.mubr.f32.gmra.mrb[0].mxu0 %v477
    %v1161 = vpop.f32.mrb[0].mxu0
    %v1162 = vadd.f32 0.0, %v1161
    %v1163 = vpop.f32.mrb[0].mxu0
    %1164 = vmatprep.mubr.f32.mxu0 %v480
    %1165 = vmatmul.mubr.f32.gmra.mrb[0].mxu0 %v479
    %v1166 = vpop.f32.mrb[0].mxu0
    %v1167 = vadd.f32 0.0, %v1166
    %v1168 = vpop.f32.mrb[0].mxu0
    %1169 = vmatprep.mubr.f32.mxu0 %v482
    %1170 = vmatmul.mubr.f32.gmra.mrb[0].mxu0 %v481
    %v1171 = vpop.f32.mrb[0].mxu0
    %v1172 = vadd.f32 0.0, %v1171
    %v1173 = vpop.f32.mrb[0].mxu0
    %1174 = vmatprep.mubr.f32.mxu0 %v484
    %1175 = vmatmul.mubr.f32.gmra.mrb[0].mxu0 %v483
    %v1176 = vpop.f32.mrb[0].mxu0
    %v1177 = vadd.f32 0.0, %v1176
    %v1178 = vpop.f32.mrb[0].mxu0
    %1179 = vmatprep.mubr.f32.mxu0 %v486
    %1180 = vmatmul.mubr.f32.gmra.mrb[0].mxu0 %v485
    %v1181 = vpop.f32.mrb[0].mxu0
    %v1182 = vadd.f32 0.0, %v1181
    %v1183 = vpop.f32.mrb[0].mxu0
    %1184 = vmatprep.mubr.f32.mxu0 %v488
    %1185 = vmatmul.mubr.f32.gmra.mrb[0].mxu0 %v487
    %v1186 = vpop.f32.mrb[0].mxu0
    %v1187 = vadd.f32 0.0, %v1186
    %v1188 = vpop.f32.mrb[0].mxu0
    %1189 = vmatprep.mubr.f32.mxu0 %v490
    %1190 = vmatmul.mubr.f32.gmra.mrb[0].mxu0 %v489
    %v1191 = vpop.f32.mrb[0].mxu0
    %v1192 = vadd.f32 0.0, %v1191
    %v1193 = vpop.f32.mrb[0].mxu0
    %1194 = vmatprep.mubr.f32.mxu0 %v492
    %1195 = vmatmul.mubr.f32.gmra.mrb[0].mxu0 %v491
    %v1196 = vpop.f32.mrb[0].mxu0
    %v1197 = vadd.f32 0.0, %v1196
    %v1198 = vpop.f32.mrb[0].mxu0
    %1199 = vmatprep.mubr.f32.mxu0 %v494
    %1200 = vmatmul.mubr.f32.gmra.mrb[0].mxu0 %v493
    %v1201 = vpop.f32.mrb[0].mxu0
    %v1202 = vadd.f32 0.0, %v1201
    %v1203 = vpop.f32.mrb[0].mxu0
    %1204 = vmatprep.mubr.f32.mxu0 %v496
    %1205 = vmatmul.mubr.f32.gmra.mrb[0].mxu0 %v495
    %v1206 = vpop.f32.mrb[0].mxu0
    %v1207 = vadd.f32 0.0, %v1206
    %v1208 = vpop.f32.mrb[0].mxu0
    %1209 = vmatprep.mubr.f32.mxu0 %v498
    %1210 = vmatmul.mubr.f32.gmra.mrb[0].mxu0 %v497
    %v1211 = vpop.f32.mrb[0].mxu0
    %v1212 = vadd.f32 0.0, %v1211
    %v1213 = vpop.f32.mrb[0].mxu0
    %1214 = vmatprep.mubr.f32.mxu0 %v500
    %1215 = vmatmul.mubr.f32.gmra.mrb[0].mxu0 %v499
    %v1216 = vpop.f32.mrb[0].mxu0
    %v1217 = vadd.f32 0.0, %v1216
    %v1218 = vpop.f32.mrb[0].mxu0
    %1219 = vmatprep.mubr.f32.mxu0 %v502
    %1220 = vmatmul.mubr.f32.gmra.mrb[0].mxu0 %v501
    %v1221 = vpop.f32.mrb[0].mxu0
    %v1222 = vadd.f32 0.0, %v1221
    %v1223 = vpop.f32.mrb[0].mxu0
    %1224 = vmatprep.mubr.f32.mxu0 %v504
    %1225 = vmatmul.mubr.f32.gmra.mrb[0].mxu0 %v503
    %v1226 = vpop.f32.mrb[0].mxu0
    %v1227 = vadd.f32 0.0, %v1226
    %v1228 = vpop.f32.mrb[0].mxu0
    %1229 = vmatprep.mubr.f32.mxu0 %v506
    %1230 = vmatmul.mubr.f32.gmra.mrb[0].mxu0 %v505
    %v1231 = vpop.f32.mrb[0].mxu0
    %v1232 = vadd.f32 0.0, %v1231
    %v1233 = vpop.f32.mrb[0].mxu0
    %1234 = vmatprep.mubr.f32.mxu0 %v508
    %1235 = vmatmul.mubr.f32.gmra.mrb[0].mxu0 %v507
    %v1236 = vpop.f32.mrb[0].mxu0
    %v1237 = vadd.f32 0.0, %v1236
    %v1238 = vpop.f32.mrb[0].mxu0
    %1239 = vmatprep.mubr.f32.mxu0 %v510
    %1240 = vmatmul.mubr.f32.gmra.mrb[0].mxu0 %v509
    %v1241 = vpop.f32.mrb[0].mxu0
    %v1242 = vadd.f32 0.0, %v1241
    %v1243 = vpop.f32.mrb[0].mxu0
    %1244 = vmatprep.mubr.f32.mxu0 %v512
    %1245 = vmatmul.mubr.f32.gmra.mrb[0].mxu0 %v511
    %v1246 = vpop.f32.mrb[0].mxu0
    %v1247 = vadd.f32 0.0, %v1246
    %v1248 = vpop.f32.mrb[0].mxu0
    %1249 = vmatprep.mubr.f32.mxu0 %v514
    %1250 = vmatmul.mubr.f32.gmra.mrb[0].mxu0 %v513
    %v1251 = vpop.f32.mrb[0].mxu0
    %v1252 = vadd.f32 0.0, %v1251
    %v1253 = vpop.f32.mrb[0].mxu0
    %1254 = vmatprep.mubr.f32.mxu0 %v516
    %1255 = vmatmul.mubr.f32.gmra.mrb[0].mxu0 %v515
    %v1256 = vpop.f32.mrb[0].mxu0
    %v1257 = vadd.f32 0.0, %v1256
    %v1258 = vpop.f32.mrb[0].mxu0
    %1259 = vmatprep.mubr.f32.mxu0 %v518
    %1260 = vmatmul.mubr.f32.gmra.mrb[0].mxu0 %v517
    %v1261 = vpop.f32.mrb[0].mxu0
    %v1262 = vadd.f32 0.0, %v1261
    %v1263 = vpop.f32.mrb[0].mxu0
    %1264 = vmatprep.mubr.f32.mxu0 %v520
    %1265 = vmatmul.mubr.f32.gmra.mrb[0].mxu0 %v519
    %v1266 = vpop.f32.mrb[0].mxu0
    %v1267 = vadd.f32 0.0, %v1266
    %v1268 = vpop.f32.mrb[0].mxu0
    %1269 = vmatprep.mubr.f32.mxu0 %v522
    %1270 = vmatmul.mubr.f32.gmra.mrb[0].mxu0 %v521
    %v1271 = vpop.f32.mrb[0].mxu0
    %v1272 = vadd.f32 0.0, %v1271
    %v1273 = vpop.f32.mrb[0].mxu0
    %1274 = vmatprep.mubr.f32.mxu0 %v524
    %1275 = vmatmul.mubr.f32.gmra.mrb[0].mxu0 %v523
    %v1276 = vpop.f32.mrb[0].mxu0
    %v1277 = vadd.f32 0.0, %v1276
    %v1278 = vpop.f32.mrb[0].mxu0
    %1279 = vdwg.mxu0
    %1280 = vmatprep.subr.mxu0 0.0
    %1281 = vmatpush1.msra.mxu0 %v525
    %1282 = vmatprep.subr.mxu0 0.0
    %1283 = vmatpush1.msra.mxu0 %v526
    %1284 = vmatprep.subr.mxu0 0.0
    %1285 = vmatpush1.msra.mxu0 %v527
    %1286 = vmatprep.subr.mxu0 0.0
    %1287 = vmatpush1.msra.mxu0 %v528
    %1288 = vmatprep.subr.mxu0 0.0
    %1289 = vmatpush1.msra.mxu0 %v529
    %1290 = vmatprep.subr.mxu0 0.0
    %1291 = vmatpush1.msra.mxu0 %v530
    %1292 = vmatprep.subr.mxu0 0.0
    %1293 = vmatpush1.msra.mxu0 %v531
    %1294 = vmatprep.subr.mxu0 0.0
    %1295 = vmatpush1.msra.mxu0 %v532
    %1296 = vmatprep.subr.mxu0 0.0
    %1297 = vmatpush1.msra.mxu0 %v533
    %1298 = vmatprep.subr.mxu0 0.0
    %1299 = vmatpush1.msra.mxu0 %v534
    %1300 = vmatprep.subr.mxu0 0.0
    %1301 = vmatpush1.msra.mxu0 %v535
    %1302 = vmatprep.subr.mxu0 0.0
    %1303 = vmatpush1.msra.mxu0 %v536
    %1304 = vmatprep.subr.mxu0 0.0
    %1305 = vmatpush1.msra.mxu0 %v537
    %1306 = vmatprep.subr.mxu0 0.0
    %1307 = vmatpush1.msra.mxu0 %v538
    %1308 = vmatprep.subr.mxu0 0.0
    %1309 = vmatpush1.msra.mxu0 %v539
    %1310 = vmatprep.subr.mxu0 0.0
    %1311 = vmatpush1.msra.mxu0 %v540
    %1312 = vmatprep.subr.mxu0 0.0
    %1313 = vmatpush1.msra.mxu0 0.0
    %1314 = vmatprep.subr.mxu0 0.0
    %1315 = vmatpush1.msra.mxu0 0.0
    %1316 = vmatprep.subr.mxu0 0.0
    %1317 = vmatpush1.msra.mxu0 0.0
    %1318 = vmatprep.subr.mxu0 0.0
    %1319 = vmatpush1.msra.mxu0 0.0
    %1320 = vmatprep.subr.mxu0 0.0
    %1321 = vmatpush1.msra.mxu0 0.0
    %1322 = vmatprep.subr.mxu0 0.0
    %1323 = vmatpush1.msra.mxu0 0.0
    %1324 = vmatprep.subr.mxu0 0.0
    %1325 = vmatpush1.msra.mxu0 0.0
    %1326 = vmatprep.subr.mxu0 0.0
    %1327 = vmatpush1.msra.mxu0 0.0
    %1328 = vmatprep.subr.mxu0 0.0
    %1329 = vmatpush1.msra.mxu0 0.0
    %1330 = vmatprep.subr.mxu0 0.0
    %1331 = vmatpush1.msra.mxu0 0.0
    %1332 = vmatprep.subr.mxu0 0.0
    %1333 = vmatpush1.msra.mxu0 0.0
    %1334 = vmatprep.subr.mxu0 0.0
    %1335 = vmatpush1.msra.mxu0 0.0
    %1336 = vmatprep.subr.mxu0 0.0
    %1337 = vmatpush1.msra.mxu0 0.0
    %1338 = vmatprep.subr.mxu0 0.0
    %1339 = vmatpush1.msra.mxu0 0.0
    %1340 = vmatprep.subr.mxu0 0.0
    %1341 = vmatpush1.msra.mxu0 0.0
    %1342 = vmatprep.subr.mxu0 0.0
    %1343 = vmatpush1.msra.mxu0 0.0
    %1344 = vmatprep.mubr.f32.mxu0 0.0
    %1345 = vmatmul.mubr.f32.gmra.mrb[0].mxu0 %v1122
    %v1346 = vpop.f32.mrb[0].mxu0
    %v1347 = vadd.f32 0.0, %v1346
    %v1348 = vpop.f32.mrb[0].mxu0
    %1349 = vmatprep.mubr.f32.mxu0 0.0
    %1350 = vmatmul.mubr.f32.gmra.mrb[0].mxu0 %v1127
    %v1351 = vpop.f32.mrb[0].mxu0
    %v1352 = vadd.f32 0.0, %v1351
    %v1353 = vpop.f32.mrb[0].mxu0
    %1354 = vmatprep.mubr.f32.mxu0 0.0
    %1355 = vmatmul.mubr.f32.gmra.mrb[0].mxu0 %v1132
    %v1356 = vpop.f32.mrb[0].mxu0
    %v1357 = vadd.f32 0.0, %v1356
    %v1358 = vpop.f32.mrb[0].mxu0
    %1359 = vmatprep.mubr.f32.mxu0 0.0
    %1360 = vmatmul.mubr.f32.gmra.mrb[0].mxu0 %v1137
    %v1361 = vpop.f32.mrb[0].mxu0
    %v1362 = vadd.f32 0.0, %v1361
    %v1363 = vpop.f32.mrb[0].mxu0
    %1364 = vmatprep.mubr.f32.mxu0 0.0
    %1365 = vmatmul.mubr.f32.gmra.mrb[0].mxu0 %v1142
    %v1366 = vpop.f32.mrb[0].mxu0
    %v1367 = vadd.f32 0.0, %v1366
    %v1368 = vpop.f32.mrb[0].mxu0
    %1369 = vmatprep.mubr.f32.mxu0 0.0
    %1370 = vmatmul.mubr.f32.gmra.mrb[0].mxu0 %v1147
    %v1371 = vpop.f32.mrb[0].mxu0
    %v1372 = vadd.f32 0.0, %v1371
    %v1373 = vpop.f32.mrb[0].mxu0
    %1374 = vmatprep.mubr.f32.mxu0 0.0
    %1375 = vmatmul.mubr.f32.gmra.mrb[0].mxu0 %v1152
    %v1376 = vpop.f32.mrb[0].mxu0
    %v1377 = vadd.f32 0.0, %v1376
    %v1378 = vpop.f32.mrb[0].mxu0
    %1379 = vmatprep.mubr.f32.mxu0 0.0
    %1380 = vmatmul.mubr.f32.gmra.mrb[0].mxu0 %v1157
    %v1381 = vpop.f32.mrb[0].mxu0
    %v1382 = vadd.f32 0.0, %v1381
    %v1383 = vpop.f32.mrb[0].mxu0
    %1384 = vmatprep.mubr.f32.mxu0 0.0
    %1385 = vmatmul.mubr.f32.gmra.mrb[0].mxu0 %v1162
    %v1386 = vpop.f32.mrb[0].mxu0
    %v1387 = vadd.f32 0.0, %v1386
    %v1388 = vpop.f32.mrb[0].mxu0
    %1389 = vmatprep.mubr.f32.mxu0 0.0
    %1390 = vmatmul.mubr.f32.gmra.mrb[0].mxu0 %v1167
    %v1391 = vpop.f32.mrb[0].mxu0
    %v1392 = vadd.f32 0.0, %v1391
    %v1393 = vpop.f32.mrb[0].mxu0
    %1394 = vmatprep.mubr.f32.mxu0 0.0
    %1395 = vmatmul.mubr.f32.gmra.mrb[0].mxu0 %v1172
    %v1396 = vpop.f32.mrb[0].mxu0
    %v1397 = vadd.f32 0.0, %v1396
    %v1398 = vpop.f32.mrb[0].mxu0
    %1399 = vmatprep.mubr.f32.mxu0 0.0
    %1400 = vmatmul.mubr.f32.gmra.mrb[0].mxu0 %v1177
    %v1401 = vpop.f32.mrb[0].mxu0
    %v1402 = vadd.f32 0.0, %v1401
    %v1403 = vpop.f32.mrb[0].mxu0
    %1404 = vmatprep.mubr.f32.mxu0 0.0
    %1405 = vmatmul.mubr.f32.gmra.mrb[0].mxu0 %v1182
    %v1406 = vpop.f32.mrb[0].mxu0
    %v1407 = vadd.f32 0.0, %v1406
    %v1408 = vpop.f32.mrb[0].mxu0
    %1409 = vmatprep.mubr.f32.mxu0 0.0
    %1410 = vmatmul.mubr.f32.gmra.mrb[0].mxu0 %v1187
    %v1411 = vpop.f32.mrb[0].mxu0
    %v1412 = vadd.f32 0.0, %v1411
    %v1413 = vpop.f32.mrb[0].mxu0
    %1414 = vmatprep.mubr.f32.mxu0 0.0
    %1415 = vmatmul.mubr.f32.gmra.mrb[0].mxu0 %v1192
    %v1416 = vpop.f32.mrb[0].mxu0
    %v1417 = vadd.f32 0.0, %v1416
    %v1418 = vpop.f32.mrb[0].mxu0
    %1419 = vmatprep.mubr.f32.mxu0 0.0
    %1420 = vmatmul.mubr.f32.gmra.mrb[0].mxu0 %v1197
    %v1421 = vpop.f32.mrb[0].mxu0
    %v1422 = vadd.f32 0.0, %v1421
    %v1423 = vpop.f32.mrb[0].mxu0
    %1424 = vmatprep.mubr.f32.mxu0 0.0
    %1425 = vmatmul.mubr.f32.gmra.mrb[0].mxu0 %v1202
    %v1426 = vpop.f32.mrb[0].mxu0
    %v1427 = vadd.f32 0.0, %v1426
    %v1428 = vpop.f32.mrb[0].mxu0
    %1429 = vmatprep.mubr.f32.mxu0 0.0
    %1430 = vmatmul.mubr.f32.gmra.mrb[0].mxu0 %v1207
    %v1431 = vpop.f32.mrb[0].mxu0
    %v1432 = vadd.f32 0.0, %v1431
    %v1433 = vpop.f32.mrb[0].mxu0
    %1434 = vmatprep.mubr.f32.mxu0 0.0
    %1435 = vmatmul.mubr.f32.gmra.mrb[0].mxu0 %v1212
    %v1436 = vpop.f32.mrb[0].mxu0
    %v1437 = vadd.f32 0.0, %v1436
    %v1438 = vpop.f32.mrb[0].mxu0
    %1439 = vmatprep.mubr.f32.mxu0 0.0
    %1440 = vmatmul.mubr.f32.gmra.mrb[0].mxu0 %v1217
    %v1441 = vpop.f32.mrb[0].mxu0
    %v1442 = vadd.f32 0.0, %v1441
    %v1443 = vpop.f32.mrb[0].mxu0
    %1444 = vmatprep.mubr.f32.mxu0 0.0
    %1445 = vmatmul.mubr.f32.gmra.mrb[0].mxu0 %v1222
    %v1446 = vpop.f32.mrb[0].mxu0
    %v1447 = vadd.f32 0.0, %v1446
    %v1448 = vpop.f32.mrb[0].mxu0
    %1449 = vmatprep.mubr.f32.mxu0 0.0
    %1450 = vmatmul.mubr.f32.gmra.mrb[0].mxu0 %v1227
    %v1451 = vpop.f32.mrb[0].mxu0
    %v1452 = vadd.f32 0.0, %v1451
    %v1453 = vpop.f32.mrb[0].mxu0
    %1454 = vmatprep.mubr.f32.mxu0 0.0
    %1455 = vmatmul.mubr.f32.gmra.mrb[0].mxu0 %v1232
    %v1456 = vpop.f32.mrb[0].mxu0
    %v1457 = vadd.f32 0.0, %v1456
    %v1458 = vpop.f32.mrb[0].mxu0
    %1459 = vmatprep.mubr.f32.mxu0 0.0
    %1460 = vmatmul.mubr.f32.gmra.mrb[0].mxu0 %v1237
    %v1461 = vpop.f32.mrb[0].mxu0
    %v1462 = vadd.f32 0.0, %v1461
    %v1463 = vpop.f32.mrb[0].mxu0
    %1464 = vmatprep.mubr.f32.mxu0 0.0
    %1465 = vmatmul.mubr.f32.gmra.mrb[0].mxu0 %v1242
    %v1466 = vpop.f32.mrb[0].mxu0
    %v1467 = vadd.f32 0.0, %v1466
    %v1468 = vpop.f32.mrb[0].mxu0
    %1469 = vmatprep.mubr.f32.mxu0 0.0
    %1470 = vmatmul.mubr.f32.gmra.mrb[0].mxu0 %v1247
    %v1471 = vpop.f32.mrb[0].mxu0
    %v1472 = vadd.f32 0.0, %v1471
    %v1473 = vpop.f32.mrb[0].mxu0
    %1474 = vmatprep.mubr.f32.mxu0 0.0
    %1475 = vmatmul.mubr.f32.gmra.mrb[0].mxu0 %v1252
    %v1476 = vpop.f32.mrb[0].mxu0
    %v1477 = vadd.f32 0.0, %v1476
    %v1478 = vpop.f32.mrb[0].mxu0
    %1479 = vmatprep.mubr.f32.mxu0 0.0
    %1480 = vmatmul.mubr.f32.gmra.mrb[0].mxu0 %v1257
    %v1481 = vpop.f32.mrb[0].mxu0
    %v1482 = vadd.f32 0.0, %v1481
    %v1483 = vpop.f32.mrb[0].mxu0
    %1484 = vmatprep.mubr.f32.mxu0 0.0
    %1485 = vmatmul.mubr.f32.gmra.mrb[0].mxu0 %v1262
    %v1486 = vpop.f32.mrb[0].mxu0
    %v1487 = vadd.f32 0.0, %v1486
    %v1488 = vpop.f32.mrb[0].mxu0
    %1489 = vmatprep.mubr.f32.mxu0 0.0
    %1490 = vmatmul.mubr.f32.gmra.mrb[0].mxu0 %v1267
    %v1491 = vpop.f32.mrb[0].mxu0
    %v1492 = vadd.f32 0.0, %v1491
    %v1493 = vpop.f32.mrb[0].mxu0
    %1494 = vmatprep.mubr.f32.mxu0 0.0
    %1495 = vmatmul.mubr.f32.gmra.mrb[0].mxu0 %v1272
    %v1496 = vpop.f32.mrb[0].mxu0
    %v1497 = vadd.f32 0.0, %v1496
    %v1498 = vpop.f32.mrb[0].mxu0
    %1499 = vmatprep.mubr.f32.mxu0 0.0
    %1500 = vmatmul.mubr.f32.gmra.mrb[0].mxu0 %v1277
    %v1501 = vpop.f32.mrb[0].mxu0
    %v1502 = vadd.f32 0.0, %v1501
    %v1503 = vpop.f32.mrb[0].mxu0
    %1504 = vdwg.mxu0
    %v1505 = vadd.f32 %v271, %v1347
    %v1506 = vadd.f32 %v276, %v1352
    %v1507 = vadd.f32 %v281, %v1357
    %v1508 = vadd.f32 %v286, %v1362
    %v1509 = vadd.f32 %v291, %v1367
    %v1510 = vadd.f32 %v296, %v1372
    %v1511 = vadd.f32 %v301, %v1377
    %v1512 = vadd.f32 %v306, %v1382
    %v1513 = vadd.f32 %v311, %v1387
    %v1514 = vadd.f32 %v316, %v1392
    %v1515 = vadd.f32 %v321, %v1397
    %v1516 = vadd.f32 %v326, %v1402
    %v1517 = vadd.f32 %v331, %v1407
    %v1518 = vadd.f32 %v336, %v1412
    %v1519 = vadd.f32 %v341, %v1417
    %v1520 = vadd.f32 %v346, %v1422
    %v1521 = vadd.f32 %v351, %v1427
    %v1522 = vadd.f32 %v356, %v1432
    %v1523 = vadd.f32 %v361, %v1437
    %v1524 = vadd.f32 %v366, %v1442
    %v1525 = vadd.f32 %v371, %v1447
    %v1526 = vadd.f32 %v376, %v1452
    %v1527 = vadd.f32 %v381, %v1457
    %v1528 = vadd.f32 %v386, %v1462
    %v1529 = vadd.f32 %v391, %v1467
    %v1530 = vadd.f32 %v396, %v1472
    %v1531 = vadd.f32 %v401, %v1477
    %v1532 = vadd.f32 %v406, %v1482
    %v1533 = vadd.f32 %v411, %v1487
    %v1534 = vadd.f32 %v416, %v1492
    %v1535 = vadd.f32 %v421, %v1497
    %v1536 = vadd.f32 %v426, %v1502
    %v1537 = vmax.f32 %v1505, 0.0
    %v1538 = vmax.f32 %v1506, 0.0
    %v1539 = vmax.f32 %v1507, 0.0
    %v1540 = vmax.f32 %v1508, 0.0
    %v1541 = vmax.f32 %v1509, 0.0
    %v1542 = vmax.f32 %v1510, 0.0
    %v1543 = vmax.f32 %v1511, 0.0
    %v1544 = vmax.f32 %v1512, 0.0
    %v1545 = vmax.f32 %v1513, 0.0
    %v1546 = vmax.f32 %v1514, 0.0
    %v1547 = vmax.f32 %v1515, 0.0
    %v1548 = vmax.f32 %v1516, 0.0
    %v1549 = vmax.f32 %v1517, 0.0
    %v1550 = vmax.f32 %v1518, 0.0
    %v1551 = vmax.f32 %v1519, 0.0
    %v1552 = vmax.f32 %v1520, 0.0
    %v1553 = vmax.f32 %v1521, 0.0
    %v1554 = vmax.f32 %v1522, 0.0
    %v1555 = vmax.f32 %v1523, 0.0
    %v1556 = vmax.f32 %v1524, 0.0
    %v1557 = vmax.f32 %v1525, 0.0
    %v1558 = vmax.f32 %v1526, 0.0
    %v1559 = vmax.f32 %v1527, 0.0
    %v1560 = vmax.f32 %v1528, 0.0
    %v1561 = vmax.f32 %v1529, 0.0
    %v1562 = vmax.f32 %v1530, 0.0
    %v1563 = vmax.f32 %v1531, 0.0
    %v1564 = vmax.f32 %v1532, 0.0
    %v1565 = vmax.f32 %v1533, 0.0
    %v1566 = vmax.f32 %v1534, 0.0
    %v1567 = vmax.f32 %v1535, 0.0
    %v1568 = vmax.f32 %v1536, 0.0
    %v1569 = vld [vmem:[#allocation8] sm:$0xff]
    %v1570 = vld [vmem:[#allocation8 + $0x8] sm:$0xff]
    %v1571 = vld [vmem:[#allocation8 + $0x10] sm:$0xff]
    %v1572 = vld [vmem:[#allocation8 + $0x18] sm:$0xff]
    %v1573 = vld [vmem:[#allocation8 + $0x20] sm:$0xff]
    %v1574 = vld [vmem:[#allocation8 + $0x28] sm:$0xff]
    %v1575 = vld [vmem:[#allocation8 + $0x30] sm:$0xff]
    %v1576 = vld [vmem:[#allocation8 + $0x38] sm:$0xff]
    %v1577 = vld [vmem:[#allocation8 + $0x40] sm:$0xff]
    %v1578 = vld [vmem:[#allocation8 + $0x48] sm:$0xff]
    %v1579 = vld [vmem:[#allocation8 + $0x50] sm:$0xff]
    %v1580 = vld [vmem:[#allocation8 + $0x58] sm:$0xff]
    %v1581 = vld [vmem:[#allocation8 + $0x60] sm:$0xff]
    %v1582 = vld [vmem:[#allocation8 + $0x68] sm:$0xff]
    %v1583 = vld [vmem:[#allocation8 + $0x70] sm:$0xff]
    %v1584 = vld [vmem:[#allocation8 + $0x78] sm:$0xff]
    %v1585 = vld [vmem:[#allocation8 + $0x80] sm:$0xff]
    %v1586 = vld [vmem:[#allocation8 + $0x88] sm:$0xff]
    %v1587 = vld [vmem:[#allocation8 + $0x90] sm:$0xff]
    %v1588 = vld [vmem:[#allocation8 + $0x98] sm:$0xff]
    %v1589 = vld [vmem:[#allocation8 + $0xa0] sm:$0xff]
    %v1590 = vld [vmem:[#allocation8 + $0xa8] sm:$0xff]
    %v1591 = vld [vmem:[#allocation8 + $0xb0] sm:$0xff]
    %v1592 = vld [vmem:[#allocation8 + $0xb8] sm:$0xff]
    %v1593 = vld [vmem:[#allocation8 + $0xc0] sm:$0xff]
    %v1594 = vld [vmem:[#allocation8 + $0xc8] sm:$0xff]
    %v1595 = vld [vmem:[#allocation8 + $0xd0] sm:$0xff]
    %v1596 = vld [vmem:[#allocation8 + $0xd8] sm:$0xff]
    %v1597 = vld [vmem:[#allocation8 + $0xe0] sm:$0xff]
    %v1598 = vld [vmem:[#allocation8 + $0xe8] sm:$0xff]
    %v1599 = vld [vmem:[#allocation8 + $0xf0] sm:$0xff]
    %v1600 = vld [vmem:[#allocation8 + $0xf8] sm:$0xff]
    %v1601 = vld [vmem:[#allocation8 + $0x100] sm:$0xff]
    %v1602 = vld [vmem:[#allocation8 + $0x108] sm:$0xff]
    %v1603 = vld [vmem:[#allocation8 + $0x110] sm:$0xff]
    %v1604 = vld [vmem:[#allocation8 + $0x118] sm:$0xff]
    %v1605 = vld [vmem:[#allocation8 + $0x120] sm:$0xff]
    %v1606 = vld [vmem:[#allocation8 + $0x128] sm:$0xff]
    %v1607 = vld [vmem:[#allocation8 + $0x130] sm:$0xff]
    %v1608 = vld [vmem:[#allocation8 + $0x138] sm:$0xff]
    %v1609 = vld [vmem:[#allocation8 + $0x140] sm:$0xff]
    %v1610 = vld [vmem:[#allocation8 + $0x148] sm:$0xff]
    %v1611 = vld [vmem:[#allocation8 + $0x150] sm:$0xff]
    %v1612 = vld [vmem:[#allocation8 + $0x158] sm:$0xff]
    %v1613 = vld [vmem:[#allocation8 + $0x160] sm:$0xff]
    %v1614 = vld [vmem:[#allocation8 + $0x168] sm:$0xff]
    %v1615 = vld [vmem:[#allocation8 + $0x170] sm:$0xff]
    %v1616 = vld [vmem:[#allocation8 + $0x178] sm:$0xff]
    %v1617 = vld [vmem:[#allocation8 + $0x180] sm:$0xff]
    %v1618 = vld [vmem:[#allocation8 + $0x188] sm:$0xff]
    %v1619 = vld [vmem:[#allocation8 + $0x190] sm:$0xff]
    %v1620 = vld [vmem:[#allocation8 + $0x198] sm:$0xff]
    %v1621 = vld [vmem:[#allocation8 + $0x1a0] sm:$0xff]
    %v1622 = vld [vmem:[#allocation8 + $0x1a8] sm:$0xff]
    %v1623 = vld [vmem:[#allocation8 + $0x1b0] sm:$0xff]
    %v1624 = vld [vmem:[#allocation8 + $0x1b8] sm:$0xff]
    %v1625 = vld [vmem:[#allocation8 + $0x1c0] sm:$0xff]
    %v1626 = vld [vmem:[#allocation8 + $0x1c8] sm:$0xff]
    %v1627 = vld [vmem:[#allocation8 + $0x1d0] sm:$0xff]
    %v1628 = vld [vmem:[#allocation8 + $0x1d8] sm:$0xff]
    %v1629 = vld [vmem:[#allocation8 + $0x1e0] sm:$0xff]
    %v1630 = vld [vmem:[#allocation8 + $0x1e8] sm:$0xff]
    %v1631 = vld [vmem:[#allocation8 + $0x1f0] sm:$0xff]
    %v1632 = vld [vmem:[#allocation8 + $0x1f8] sm:$0xff]
    %1633 = vmatprep.subr.mxu0 0.0
    %1634 = vmatpush1.msra.mxu0 %v1537
    %1635 = vmatprep.subr.mxu0 0.0
    %1636 = vmatpush1.msra.mxu0 %v1538
    %1637 = vmatprep.subr.mxu0 0.0
    %1638 = vmatpush1.msra.mxu0 %v1539
    %1639 = vmatprep.subr.mxu0 0.0
    %1640 = vmatpush1.msra.mxu0 %v1540
    %1641 = vmatprep.subr.mxu0 0.0
    %1642 = vmatpush1.msra.mxu0 %v1541
    %1643 = vmatprep.subr.mxu0 0.0
    %1644 = vmatpush1.msra.mxu0 %v1542
    %1645 = vmatprep.subr.mxu0 0.0
    %1646 = vmatpush1.msra.mxu0 %v1543
    %1647 = vmatprep.subr.mxu0 0.0
    %1648 = vmatpush1.msra.mxu0 %v1544
    %1649 = vmatprep.subr.mxu0 0.0
    %1650 = vmatpush1.msra.mxu0 %v1545
    %1651 = vmatprep.subr.mxu0 0.0
    %1652 = vmatpush1.msra.mxu0 %v1546
    %1653 = vmatprep.subr.mxu0 0.0
    %1654 = vmatpush1.msra.mxu0 %v1547
    %1655 = vmatprep.subr.mxu0 0.0
    %1656 = vmatpush1.msra.mxu0 %v1548
    %1657 = vmatprep.subr.mxu0 0.0
    %1658 = vmatpush1.msra.mxu0 %v1549
    %1659 = vmatprep.subr.mxu0 0.0
    %1660 = vmatpush1.msra.mxu0 %v1550
    %1661 = vmatprep.subr.mxu0 0.0
    %1662 = vmatpush1.msra.mxu0 %v1551
    %1663 = vmatprep.subr.mxu0 0.0
    %1664 = vmatpush1.msra.mxu0 %v1552
    %1665 = vmatprep.subr.mxu0 0.0
    %1666 = vmatpush1.msra.mxu0 %v1553
    %1667 = vmatprep.subr.mxu0 0.0
    %1668 = vmatpush1.msra.mxu0 %v1554
    %1669 = vmatprep.subr.mxu0 0.0
    %1670 = vmatpush1.msra.mxu0 %v1555
    %1671 = vmatprep.subr.mxu0 0.0
    %1672 = vmatpush1.msra.mxu0 %v1556
    %1673 = vmatprep.subr.mxu0 0.0
    %1674 = vmatpush1.msra.mxu0 %v1557
    %1675 = vmatprep.subr.mxu0 0.0
    %1676 = vmatpush1.msra.mxu0 %v1558
    %1677 = vmatprep.subr.mxu0 0.0
    %1678 = vmatpush1.msra.mxu0 %v1559
    %1679 = vmatprep.subr.mxu0 0.0
    %1680 = vmatpush1.msra.mxu0 %v1560
    %1681 = vmatprep.subr.mxu0 0.0
    %1682 = vmatpush1.msra.mxu0 %v1561
    %1683 = vmatprep.subr.mxu0 0.0
    %1684 = vmatpush1.msra.mxu0 %v1562
    %1685 = vmatprep.subr.mxu0 0.0
    %1686 = vmatpush1.msra.mxu0 %v1563
    %1687 = vmatprep.subr.mxu0 0.0
    %1688 = vmatpush1.msra.mxu0 %v1564
    %1689 = vmatprep.subr.mxu0 0.0
    %1690 = vmatpush1.msra.mxu0 %v1565
    %1691 = vmatprep.subr.mxu0 0.0
    %1692 = vmatpush1.msra.mxu0 %v1566
    %1693 = vmatprep.subr.mxu0 0.0
    %1694 = vmatpush1.msra.mxu0 %v1567
    %1695 = vmatprep.subr.mxu0 0.0
    %1696 = vmatpush1.msra.mxu0 %v1568
    %1697 = vmatprep.mubr.f32.mxu0 %v1570
    %1698 = vmatmul.mubr.f32.gmra.mrb[0].mxu0 %v1569
    %v1699 = vpop.f32.mrb[0].mxu0
    %v1700 = vadd.f32 0.0, %v1699
    %v1701 = vpop.f32.mrb[0].mxu0
    %1702 = vmatprep.mubr.f32.mxu0 %v1572
    %1703 = vmatmul.mubr.f32.gmra.mrb[0].mxu0 %v1571
    %v1704 = vpop.f32.mrb[0].mxu0
    %v1705 = vadd.f32 0.0, %v1704
    %v1706 = vpop.f32.mrb[0].mxu0
    %1707 = vmatprep.mubr.f32.mxu0 %v1574
    %1708 = vmatmul.mubr.f32.gmra.mrb[0].mxu0 %v1573
    %v1709 = vpop.f32.mrb[0].mxu0
    %v1710 = vadd.f32 0.0, %v1709
    %v1711 = vpop.f32.mrb[0].mxu0
    %1712 = vmatprep.mubr.f32.mxu0 %v1576
    %1713 = vmatmul.mubr.f32.gmra.mrb[0].mxu0 %v1575
    %v1714 = vpop.f32.mrb[0].mxu0
    %v1715 = vadd.f32 0.0, %v1714
    %v1716 = vpop.f32.mrb[0].mxu0
    %1717 = vmatprep.mubr.f32.mxu0 %v1578
    %1718 = vmatmul.mubr.f32.gmra.mrb[0].mxu0 %v1577
    %v1719 = vpop.f32.mrb[0].mxu0
    %v1720 = vadd.f32 0.0, %v1719
    %v1721 = vpop.f32.mrb[0].mxu0
    %1722 = vmatprep.mubr.f32.mxu0 %v1580
    %1723 = vmatmul.mubr.f32.gmra.mrb[0].mxu0 %v1579
    %v1724 = vpop.f32.mrb[0].mxu0
    %v1725 = vadd.f32 0.0, %v1724
    %v1726 = vpop.f32.mrb[0].mxu0
    %1727 = vmatprep.mubr.f32.mxu0 %v1582
    %1728 = vmatmul.mubr.f32.gmra.mrb[0].mxu0 %v1581
    %v1729 = vpop.f32.mrb[0].mxu0
    %v1730 = vadd.f32 0.0, %v1729
    %v1731 = vpop.f32.mrb[0].mxu0
    %1732 = vmatprep.mubr.f32.mxu0 %v1584
    %1733 = vmatmul.mubr.f32.gmra.mrb[0].mxu0 %v1583
    %v1734 = vpop.f32.mrb[0].mxu0
    %v1735 = vadd.f32 0.0, %v1734
    %v1736 = vpop.f32.mrb[0].mxu0
    %1737 = vmatprep.mubr.f32.mxu0 %v1586
    %1738 = vmatmul.mubr.f32.gmra.mrb[0].mxu0 %v1585
    %v1739 = vpop.f32.mrb[0].mxu0
    %v1740 = vadd.f32 0.0, %v1739
    %v1741 = vpop.f32.mrb[0].mxu0
    %1742 = vmatprep.mubr.f32.mxu0 %v1588
    %1743 = vmatmul.mubr.f32.gmra.mrb[0].mxu0 %v1587
    %v1744 = vpop.f32.mrb[0].mxu0
    %v1745 = vadd.f32 0.0, %v1744
    %v1746 = vpop.f32.mrb[0].mxu0
    %1747 = vmatprep.mubr.f32.mxu0 %v1590
    %1748 = vmatmul.mubr.f32.gmra.mrb[0].mxu0 %v1589
    %v1749 = vpop.f32.mrb[0].mxu0
    %v1750 = vadd.f32 0.0, %v1749
    %v1751 = vpop.f32.mrb[0].mxu0
    %1752 = vmatprep.mubr.f32.mxu0 %v1592
    %1753 = vmatmul.mubr.f32.gmra.mrb[0].mxu0 %v1591
    %v1754 = vpop.f32.mrb[0].mxu0
    %v1755 = vadd.f32 0.0, %v1754
    %v1756 = vpop.f32.mrb[0].mxu0
    %1757 = vmatprep.mubr.f32.mxu0 %v1594
    %1758 = vmatmul.mubr.f32.gmra.mrb[0].mxu0 %v1593
    %v1759 = vpop.f32.mrb[0].mxu0
    %v1760 = vadd.f32 0.0, %v1759
    %v1761 = vpop.f32.mrb[0].mxu0
    %1762 = vmatprep.mubr.f32.mxu0 %v1596
    %1763 = vmatmul.mubr.f32.gmra.mrb[0].mxu0 %v1595
    %v1764 = vpop.f32.mrb[0].mxu0
    %v1765 = vadd.f32 0.0, %v1764
    %v1766 = vpop.f32.mrb[0].mxu0
    %1767 = vmatprep.mubr.f32.mxu0 %v1598
    %1768 = vmatmul.mubr.f32.gmra.mrb[0].mxu0 %v1597
    %v1769 = vpop.f32.mrb[0].mxu0
    %v1770 = vadd.f32 0.0, %v1769
    %v1771 = vpop.f32.mrb[0].mxu0
    %1772 = vmatprep.mubr.f32.mxu0 %v1600
    %1773 = vmatmul.mubr.f32.gmra.mrb[0].mxu0 %v1599
    %v1774 = vpop.f32.mrb[0].mxu0
    %v1775 = vadd.f32 0.0, %v1774
    %v1776 = vpop.f32.mrb[0].mxu0
    %1777 = vmatprep.mubr.f32.mxu0 %v1602
    %1778 = vmatmul.mubr.f32.gmra.mrb[0].mxu0 %v1601
    %v1779 = vpop.f32.mrb[0].mxu0
    %v1780 = vadd.f32 0.0, %v1779
    %v1781 = vpop.f32.mrb[0].mxu0
    %1782 = vmatprep.mubr.f32.mxu0 %v1604
    %1783 = vmatmul.mubr.f32.gmra.mrb[0].mxu0 %v1603
    %v1784 = vpop.f32.mrb[0].mxu0
    %v1785 = vadd.f32 0.0, %v1784
    %v1786 = vpop.f32.mrb[0].mxu0
    %1787 = vmatprep.mubr.f32.mxu0 %v1606
    %1788 = vmatmul.mubr.f32.gmra.mrb[0].mxu0 %v1605
    %v1789 = vpop.f32.mrb[0].mxu0
    %v1790 = vadd.f32 0.0, %v1789
    %v1791 = vpop.f32.mrb[0].mxu0
    %1792 = vmatprep.mubr.f32.mxu0 %v1608
    %1793 = vmatmul.mubr.f32.gmra.mrb[0].mxu0 %v1607
    %v1794 = vpop.f32.mrb[0].mxu0
    %v1795 = vadd.f32 0.0, %v1794
    %v1796 = vpop.f32.mrb[0].mxu0
    %1797 = vmatprep.mubr.f32.mxu0 %v1610
    %1798 = vmatmul.mubr.f32.gmra.mrb[0].mxu0 %v1609
    %v1799 = vpop.f32.mrb[0].mxu0
    %v1800 = vadd.f32 0.0, %v1799
    %v1801 = vpop.f32.mrb[0].mxu0
    %1802 = vmatprep.mubr.f32.mxu0 %v1612
    %1803 = vmatmul.mubr.f32.gmra.mrb[0].mxu0 %v1611
    %v1804 = vpop.f32.mrb[0].mxu0
    %v1805 = vadd.f32 0.0, %v1804
    %v1806 = vpop.f32.mrb[0].mxu0
    %1807 = vmatprep.mubr.f32.mxu0 %v1614
    %1808 = vmatmul.mubr.f32.gmra.mrb[0].mxu0 %v1613
    %v1809 = vpop.f32.mrb[0].mxu0
    %v1810 = vadd.f32 0.0, %v1809
    %v1811 = vpop.f32.mrb[0].mxu0
    %1812 = vmatprep.mubr.f32.mxu0 %v1616
    %1813 = vmatmul.mubr.f32.gmra.mrb[0].mxu0 %v1615
    %v1814 = vpop.f32.mrb[0].mxu0
    %v1815 = vadd.f32 0.0, %v1814
    %v1816 = vpop.f32.mrb[0].mxu0
    %1817 = vmatprep.mubr.f32.mxu0 %v1618
    %1818 = vmatmul.mubr.f32.gmra.mrb[0].mxu0 %v1617
    %v1819 = vpop.f32.mrb[0].mxu0
    %v1820 = vadd.f32 0.0, %v1819
    %v1821 = vpop.f32.mrb[0].mxu0
    %1822 = vmatprep.mubr.f32.mxu0 %v1620
    %1823 = vmatmul.mubr.f32.gmra.mrb[0].mxu0 %v1619
    %v1824 = vpop.f32.mrb[0].mxu0
    %v1825 = vadd.f32 0.0, %v1824
    %v1826 = vpop.f32.mrb[0].mxu0
    %1827 = vmatprep.mubr.f32.mxu0 %v1622
    %1828 = vmatmul.mubr.f32.gmra.mrb[0].mxu0 %v1621
    %v1829 = vpop.f32.mrb[0].mxu0
    %v1830 = vadd.f32 0.0, %v1829
    %v1831 = vpop.f32.mrb[0].mxu0
    %1832 = vmatprep.mubr.f32.mxu0 %v1624
    %1833 = vmatmul.mubr.f32.gmra.mrb[0].mxu0 %v1623
    %v1834 = vpop.f32.mrb[0].mxu0
    %v1835 = vadd.f32 0.0, %v1834
    %v1836 = vpop.f32.mrb[0].mxu0
    %1837 = vmatprep.mubr.f32.mxu0 %v1626
    %1838 = vmatmul.mubr.f32.gmra.mrb[0].mxu0 %v1625
    %v1839 = vpop.f32.mrb[0].mxu0
    %v1840 = vadd.f32 0.0, %v1839
    %v1841 = vpop.f32.mrb[0].mxu0
    %1842 = vmatprep.mubr.f32.mxu0 %v1628
    %1843 = vmatmul.mubr.f32.gmra.mrb[0].mxu0 %v1627
    %v1844 = vpop.f32.mrb[0].mxu0
    %v1845 = vadd.f32 0.0, %v1844
    %v1846 = vpop.f32.mrb[0].mxu0
    %1847 = vmatprep.mubr.f32.mxu0 %v1630
    %1848 = vmatmul.mubr.f32.gmra.mrb[0].mxu0 %v1629
    %v1849 = vpop.f32.mrb[0].mxu0
    %v1850 = vadd.f32 0.0, %v1849
    %v1851 = vpop.f32.mrb[0].mxu0
    %1852 = vmatprep.mubr.f32.mxu0 %v1632
    %1853 = vmatmul.mubr.f32.gmra.mrb[0].mxu0 %v1631
    %v1854 = vpop.f32.mrb[0].mxu0
    %v1855 = vadd.f32 0.0, %v1854
    %v1856 = vpop.f32.mrb[0].mxu0
    %1857 = vdwg.mxu0
    %v1858 = vld [vmem:[#allocation2] sm:$0xff]
    %v1859 = vld [vmem:[#allocation2 + $0x8] sm:$0xff]
    %v1860 = vld [vmem:[#allocation2 + $0x10] sm:$0xff]
    %v1861 = vld [vmem:[#allocation2 + $0x18] sm:$0xff]
    %v1862 = vld [vmem:[#allocation2 + $0x20] sm:$0xff]
    %v1863 = vld [vmem:[#allocation2 + $0x28] sm:$0xff]
    %v1864 = vld [vmem:[#allocation2 + $0x30] sm:$0xff]
    %v1865 = vld [vmem:[#allocation2 + $0x38] sm:$0xff]
    %v1866 = vld [vmem:[#allocation2 + $0x40] sm:$0xff]
    %v1867 = vld [vmem:[#allocation2 + $0x48] sm:$0xff]
    %v1868 = vld [vmem:[#allocation2 + $0x50] sm:$0xff]
    %v1869 = vld [vmem:[#allocation2 + $0x58] sm:$0xff]
    %v1870 = vld [vmem:[#allocation2 + $0x60] sm:$0xff]
    %v1871 = vld [vmem:[#allocation2 + $0x68] sm:$0xff]
    %v1872 = vld [vmem:[#allocation2 + $0x70] sm:$0xff]
    %v1873 = vld [vmem:[#allocation2 + $0x78] sm:$0xff]
    %v1874 = vld [vmem:[#allocation2 + $0x80] sm:$0xff]
    %v1875 = vld [vmem:[#allocation2 + $0x88] sm:$0xff]
    %v1876 = vld [vmem:[#allocation2 + $0x90] sm:$0xff]
    %v1877 = vld [vmem:[#allocation2 + $0x98] sm:$0xff]
    %v1878 = vld [vmem:[#allocation2 + $0xa0] sm:$0xff]
    %v1879 = vld [vmem:[#allocation2 + $0xa8] sm:$0xff]
    %v1880 = vld [vmem:[#allocation2 + $0xb0] sm:$0xff]
    %v1881 = vld [vmem:[#allocation2 + $0xb8] sm:$0xff]
    %v1882 = vld [vmem:[#allocation2 + $0xc0] sm:$0xff]
    %v1883 = vld [vmem:[#allocation2 + $0xc8] sm:$0xff]
    %v1884 = vld [vmem:[#allocation2 + $0xd0] sm:$0xff]
    %v1885 = vld [vmem:[#allocation2 + $0xd8] sm:$0xff]
    %v1886 = vld [vmem:[#allocation2 + $0xe0] sm:$0xff]
    %v1887 = vld [vmem:[#allocation2 + $0xe8] sm:$0xff]
    %v1888 = vld [vmem:[#allocation2 + $0xf0] sm:$0xff]
    %v1889 = vld [vmem:[#allocation2 + $0xf8] sm:$0xff]
    %v1890 = vld [vmem:[#allocation14] sm:$0xff]
    %v1891 = vld [vmem:[#allocation14 + $0x8] sm:$0xff]
    %v1892 = vld [vmem:[#allocation14 + $0x10] sm:$0xff]
    %v1893 = vld [vmem:[#allocation14 + $0x18] sm:$0xff]
    %v1894 = vld [vmem:[#allocation14 + $0x20] sm:$0xff]
    %v1895 = vld [vmem:[#allocation14 + $0x28] sm:$0xff]
    %v1896 = vld [vmem:[#allocation14 + $0x30] sm:$0xff]
    %v1897 = vld [vmem:[#allocation14 + $0x38] sm:$0xff]
    %v1898 = vld [vmem:[#allocation14 + $0x40] sm:$0xff]
    %v1899 = vld [vmem:[#allocation14 + $0x48] sm:$0xff]
    %v1900 = vld [vmem:[#allocation14 + $0x50] sm:$0xff]
    %v1901 = vld [vmem:[#allocation14 + $0x58] sm:$0xff]
    %v1902 = vld [vmem:[#allocation14 + $0x60] sm:$0xff]
    %v1903 = vld [vmem:[#allocation14 + $0x68] sm:$0xff]
    %v1904 = vld [vmem:[#allocation14 + $0x70] sm:$0xff]
    %v1905 = vld [vmem:[#allocation14 + $0x78] sm:$0xff]
    %v1906 = vld [vmem:[#allocation16] sm:$0xff]
    %v1907 = vld [vmem:[#allocation16 + $0x8] sm:$0xff]
    %v1908 = vld [vmem:[#allocation16 + $0x10] sm:$0xff]
    %v1909 = vld [vmem:[#allocation16 + $0x18] sm:$0xff]
    %v1910 = vld [vmem:[#allocation16 + $0x20] sm:$0xff]
    %v1911 = vld [vmem:[#allocation16 + $0x28] sm:$0xff]
    %v1912 = vld [vmem:[#allocation16 + $0x30] sm:$0xff]
    %v1913 = vld [vmem:[#allocation16 + $0x38] sm:$0xff]
    %v1914 = vld [vmem:[#allocation16 + $0x40] sm:$0xff]
    %v1915 = vld [vmem:[#allocation16 + $0x48] sm:$0xff]
    %v1916 = vld [vmem:[#allocation16 + $0x50] sm:$0xff]
    %v1917 = vld [vmem:[#allocation16 + $0x58] sm:$0xff]
    %v1918 = vld [vmem:[#allocation16 + $0x60] sm:$0xff]
    %v1919 = vld [vmem:[#allocation16 + $0x68] sm:$0xff]
    %v1920 = vld [vmem:[#allocation16 + $0x70] sm:$0xff]
    %v1921 = vld [vmem:[#allocation16 + $0x78] sm:$0xff]
    %1922 = vmatprep.subr.mxu0 0.0
    %1923 = vmatpush1.msra.mxu0 %v1906
    %1924 = vmatprep.subr.mxu0 0.0
    %1925 = vmatpush1.msra.mxu0 %v1907
    %1926 = vmatprep.subr.mxu0 0.0
    %1927 = vmatpush1.msra.mxu0 %v1908
    %1928 = vmatprep.subr.mxu0 0.0
    %1929 = vmatpush1.msra.mxu0 %v1909
    %1930 = vmatprep.subr.mxu0 0.0
    %1931 = vmatpush1.msra.mxu0 %v1910
    %1932 = vmatprep.subr.mxu0 0.0
    %1933 = vmatpush1.msra.mxu0 %v1911
    %1934 = vmatprep.subr.mxu0 0.0
    %1935 = vmatpush1.msra.mxu0 %v1912
    %1936 = vmatprep.subr.mxu0 0.0
    %1937 = vmatpush1.msra.mxu0 %v1913
    %1938 = vmatprep.subr.mxu0 0.0
    %1939 = vmatpush1.msra.mxu0 %v1914
    %1940 = vmatprep.subr.mxu0 0.0
    %1941 = vmatpush1.msra.mxu0 %v1915
    %1942 = vmatprep.subr.mxu0 0.0
    %1943 = vmatpush1.msra.mxu0 %v1916
    %1944 = vmatprep.subr.mxu0 0.0
    %1945 = vmatpush1.msra.mxu0 %v1917
    %1946 = vmatprep.subr.mxu0 0.0
    %1947 = vmatpush1.msra.mxu0 %v1918
    %1948 = vmatprep.subr.mxu0 0.0
    %1949 = vmatpush1.msra.mxu0 %v1919
    %1950 = vmatprep.subr.mxu0 0.0
    %1951 = vmatpush1.msra.mxu0 %v1920
    %1952 = vmatprep.subr.mxu0 0.0
    %1953 = vmatpush1.msra.mxu0 %v1921
    %1954 = vmatprep.subr.mxu0 0.0
    %1955 = vmatpush1.msra.mxu0 0.0
    %1956 = vmatprep.subr.mxu0 0.0
    %1957 = vmatpush1.msra.mxu0 0.0
    %1958 = vmatprep.subr.mxu0 0.0
    %1959 = vmatpush1.msra.mxu0 0.0
    %1960 = vmatprep.subr.mxu0 0.0
    %1961 = vmatpush1.msra.mxu0 0.0
    %1962 = vmatprep.subr.mxu0 0.0
    %1963 = vmatpush1.msra.mxu0 0.0
    %1964 = vmatprep.subr.mxu0 0.0
    %1965 = vmatpush1.msra.mxu0 0.0
    %1966 = vmatprep.subr.mxu0 0.0
    %1967 = vmatpush1.msra.mxu0 0.0
    %1968 = vmatprep.subr.mxu0 0.0
    %1969 = vmatpush1.msra.mxu0 0.0
    %1970 = vmatprep.subr.mxu0 0.0
    %1971 = vmatpush1.msra.mxu0 0.0
    %1972 = vmatprep.subr.mxu0 0.0
    %1973 = vmatpush1.msra.mxu0 0.0
    %1974 = vmatprep.subr.mxu0 0.0
    %1975 = vmatpush1.msra.mxu0 0.0
    %1976 = vmatprep.subr.mxu0 0.0
    %1977 = vmatpush1.msra.mxu0 0.0
    %1978 = vmatprep.subr.mxu0 0.0
    %1979 = vmatpush1.msra.mxu0 0.0
    %1980 = vmatprep.subr.mxu0 0.0
    %1981 = vmatpush1.msra.mxu0 0.0
    %1982 = vmatprep.subr.mxu0 0.0
    %1983 = vmatpush1.msra.mxu0 0.0
    %1984 = vmatprep.subr.mxu0 0.0
    %1985 = vmatpush1.msra.mxu0 0.0
    %1986 = vmatprep.mubr.f32.mxu0 0.0
    %1987 = vmatmul.mubr.f32.gmra.mrb[0].mxu0 %v1700
    %v1988 = vpop.f32.mrb[0].mxu0
    %v1989 = vadd.f32 0.0, %v1988
    %v1990 = vpop.f32.mrb[0].mxu0
    %1991 = vmatprep.mubr.f32.mxu0 0.0
    %1992 = vmatmul.mubr.f32.gmra.mrb[0].mxu0 %v1705
    %v1993 = vpop.f32.mrb[0].mxu0
    %v1994 = vadd.f32 0.0, %v1993
    %v1995 = vpop.f32.mrb[0].mxu0
    %1996 = vmatprep.mubr.f32.mxu0 0.0
    %1997 = vmatmul.mubr.f32.gmra.mrb[0].mxu0 %v1710
    %v1998 = vpop.f32.mrb[0].mxu0
    %v1999 = vadd.f32 0.0, %v1998
    %v2000 = vpop.f32.mrb[0].mxu0
    %2001 = vmatprep.mubr.f32.mxu0 0.0
    %2002 = vmatmul.mubr.f32.gmra.mrb[0].mxu0 %v1715
    %v2003 = vpop.f32.mrb[0].mxu0
    %v2004 = vadd.f32 0.0, %v2003
    %v2005 = vpop.f32.mrb[0].mxu0
    %2006 = vmatprep.mubr.f32.mxu0 0.0
    %2007 = vmatmul.mubr.f32.gmra.mrb[0].mxu0 %v1720
    %v2008 = vpop.f32.mrb[0].mxu0
    %v2009 = vadd.f32 0.0, %v2008
    %v2010 = vpop.f32.mrb[0].mxu0
    %2011 = vmatprep.mubr.f32.mxu0 0.0
    %2012 = vmatmul.mubr.f32.gmra.mrb[0].mxu0 %v1725
    %v2013 = vpop.f32.mrb[0].mxu0
    %v2014 = vadd.f32 0.0, %v2013
    %v2015 = vpop.f32.mrb[0].mxu0
    %2016 = vmatprep.mubr.f32.mxu0 0.0
    %2017 = vmatmul.mubr.f32.gmra.mrb[0].mxu0 %v1730
    %v2018 = vpop.f32.mrb[0].mxu0
    %v2019 = vadd.f32 0.0, %v2018
    %v2020 = vpop.f32.mrb[0].mxu0
    %2021 = vmatprep.mubr.f32.mxu0 0.0
    %2022 = vmatmul.mubr.f32.gmra.mrb[0].mxu0 %v1735
    %v2023 = vpop.f32.mrb[0].mxu0
    %v2024 = vadd.f32 0.0, %v2023
    %v2025 = vpop.f32.mrb[0].mxu0
    %2026 = vmatprep.mubr.f32.mxu0 0.0
    %2027 = vmatmul.mubr.f32.gmra.mrb[0].mxu0 %v1740
    %v2028 = vpop.f32.mrb[0].mxu0
    %v2029 = vadd.f32 0.0, %v2028
    %v2030 = vpop.f32.mrb[0].mxu0
    %2031 = vmatprep.mubr.f32.mxu0 0.0
    %2032 = vmatmul.mubr.f32.gmra.mrb[0].mxu0 %v1745
    %v2033 = vpop.f32.mrb[0].mxu0
    %v2034 = vadd.f32 0.0, %v2033
    %v2035 = vpop.f32.mrb[0].mxu0
    %2036 = vmatprep.mubr.f32.mxu0 0.0
    %2037 = vmatmul.mubr.f32.gmra.mrb[0].mxu0 %v1750
    %v2038 = vpop.f32.mrb[0].mxu0
    %v2039 = vadd.f32 0.0, %v2038
    %v2040 = vpop.f32.mrb[0].mxu0
    %2041 = vmatprep.mubr.f32.mxu0 0.0
    %2042 = vmatmul.mubr.f32.gmra.mrb[0].mxu0 %v1755
    %v2043 = vpop.f32.mrb[0].mxu0
    %v2044 = vadd.f32 0.0, %v2043
    %v2045 = vpop.f32.mrb[0].mxu0
    %2046 = vmatprep.mubr.f32.mxu0 0.0
    %2047 = vmatmul.mubr.f32.gmra.mrb[0].mxu0 %v1760
    %v2048 = vpop.f32.mrb[0].mxu0
    %v2049 = vadd.f32 0.0, %v2048
    %v2050 = vpop.f32.mrb[0].mxu0
    %2051 = vmatprep.mubr.f32.mxu0 0.0
    %2052 = vmatmul.mubr.f32.gmra.mrb[0].mxu0 %v1765
    %v2053 = vpop.f32.mrb[0].mxu0
    %v2054 = vadd.f32 0.0, %v2053
    %v2055 = vpop.f32.mrb[0].mxu0
    %2056 = vmatprep.mubr.f32.mxu0 0.0
    %2057 = vmatmul.mubr.f32.gmra.mrb[0].mxu0 %v1770
    %v2058 = vpop.f32.mrb[0].mxu0
    %v2059 = vadd.f32 0.0, %v2058
    %v2060 = vpop.f32.mrb[0].mxu0
    %2061 = vmatprep.mubr.f32.mxu0 0.0
    %2062 = vmatmul.mubr.f32.gmra.mrb[0].mxu0 %v1775
    %v2063 = vpop.f32.mrb[0].mxu0
    %v2064 = vadd.f32 0.0, %v2063
    %v2065 = vpop.f32.mrb[0].mxu0
    %2066 = vmatprep.mubr.f32.mxu0 0.0
    %2067 = vmatmul.mubr.f32.gmra.mrb[0].mxu0 %v1780
    %v2068 = vpop.f32.mrb[0].mxu0
    %v2069 = vadd.f32 0.0, %v2068
    %v2070 = vpop.f32.mrb[0].mxu0
    %2071 = vmatprep.mubr.f32.mxu0 0.0
    %2072 = vmatmul.mubr.f32.gmra.mrb[0].mxu0 %v1785
    %v2073 = vpop.f32.mrb[0].mxu0
    %v2074 = vadd.f32 0.0, %v2073
    %v2075 = vpop.f32.mrb[0].mxu0
    %2076 = vmatprep.mubr.f32.mxu0 0.0
    %2077 = vmatmul.mubr.f32.gmra.mrb[0].mxu0 %v1790
    %v2078 = vpop.f32.mrb[0].mxu0
    %v2079 = vadd.f32 0.0, %v2078
    %v2080 = vpop.f32.mrb[0].mxu0
    %2081 = vmatprep.mubr.f32.mxu0 0.0
    %2082 = vmatmul.mubr.f32.gmra.mrb[0].mxu0 %v1795
    %v2083 = vpop.f32.mrb[0].mxu0
    %v2084 = vadd.f32 0.0, %v2083
    %v2085 = vpop.f32.mrb[0].mxu0
    %2086 = vmatprep.mubr.f32.mxu0 0.0
    %2087 = vmatmul.mubr.f32.gmra.mrb[0].mxu0 %v1800
    %v2088 = vpop.f32.mrb[0].mxu0
    %v2089 = vadd.f32 0.0, %v2088
    %v2090 = vpop.f32.mrb[0].mxu0
    %2091 = vmatprep.mubr.f32.mxu0 0.0
    %2092 = vmatmul.mubr.f32.gmra.mrb[0].mxu0 %v1805
    %v2093 = vpop.f32.mrb[0].mxu0
    %v2094 = vadd.f32 0.0, %v2093
    %v2095 = vpop.f32.mrb[0].mxu0
    %2096 = vmatprep.mubr.f32.mxu0 0.0
    %2097 = vmatmul.mubr.f32.gmra.mrb[0].mxu0 %v1810
    %v2098 = vpop.f32.mrb[0].mxu0
    %v2099 = vadd.f32 0.0, %v2098
    %v2100 = vpop.f32.mrb[0].mxu0
    %2101 = vmatprep.mubr.f32.mxu0 0.0
    %2102 = vmatmul.mubr.f32.gmra.mrb[0].mxu0 %v1815
    %v2103 = vpop.f32.mrb[0].mxu0
    %v2104 = vadd.f32 0.0, %v2103
    %v2105 = vpop.f32.mrb[0].mxu0
    %2106 = vmatprep.mubr.f32.mxu0 0.0
    %2107 = vmatmul.mubr.f32.gmra.mrb[0].mxu0 %v1820
    %v2108 = vpop.f32.mrb[0].mxu0
    %v2109 = vadd.f32 0.0, %v2108
    %v2110 = vpop.f32.mrb[0].mxu0
    %2111 = vmatprep.mubr.f32.mxu0 0.0
    %2112 = vmatmul.mubr.f32.gmra.mrb[0].mxu0 %v1825
    %v2113 = vpop.f32.mrb[0].mxu0
    %v2114 = vadd.f32 0.0, %v2113
    %v2115 = vpop.f32.mrb[0].mxu0
    %2116 = vmatprep.mubr.f32.mxu0 0.0
    %2117 = vmatmul.mubr.f32.gmra.mrb[0].mxu0 %v1830
    %v2118 = vpop.f32.mrb[0].mxu0
    %v2119 = vadd.f32 0.0, %v2118
    %v2120 = vpop.f32.mrb[0].mxu0
    %2121 = vmatprep.mubr.f32.mxu0 0.0
    %2122 = vmatmul.mubr.f32.gmra.mrb[0].mxu0 %v1835
    %v2123 = vpop.f32.mrb[0].mxu0
    %v2124 = vadd.f32 0.0, %v2123
    %v2125 = vpop.f32.mrb[0].mxu0
    %2126 = vmatprep.mubr.f32.mxu0 0.0
    %2127 = vmatmul.mubr.f32.gmra.mrb[0].mxu0 %v1840
    %v2128 = vpop.f32.mrb[0].mxu0
    %v2129 = vadd.f32 0.0, %v2128
    %v2130 = vpop.f32.mrb[0].mxu0
    %2131 = vmatprep.mubr.f32.mxu0 0.0
    %2132 = vmatmul.mubr.f32.gmra.mrb[0].mxu0 %v1845
    %v2133 = vpop.f32.mrb[0].mxu0
    %v2134 = vadd.f32 0.0, %v2133
    %v2135 = vpop.f32.mrb[0].mxu0
    %2136 = vmatprep.mubr.f32.mxu0 0.0
    %2137 = vmatmul.mubr.f32.gmra.mrb[0].mxu0 %v1850
    %v2138 = vpop.f32.mrb[0].mxu0
    %v2139 = vadd.f32 0.0, %v2138
    %v2140 = vpop.f32.mrb[0].mxu0
    %2141 = vmatprep.mubr.f32.mxu0 0.0
    %2142 = vmatmul.mubr.f32.gmra.mrb[0].mxu0 %v1855
    %v2143 = vpop.f32.mrb[0].mxu0
    %v2144 = vadd.f32 0.0, %v2143
    %v2145 = vpop.f32.mrb[0].mxu0
    %2146 = vdwg.mxu0
    %2147 = vmatprep.subr.mxu0 0.0
    %2148 = vmatpush1.msra.mxu0 %v1890
    %2149 = vmatprep.subr.mxu0 0.0
    %2150 = vmatpush1.msra.mxu0 %v1891
    %2151 = vmatprep.subr.mxu0 0.0
    %2152 = vmatpush1.msra.mxu0 %v1892
    %2153 = vmatprep.subr.mxu0 0.0
    %2154 = vmatpush1.msra.mxu0 %v1893
    %2155 = vmatprep.subr.mxu0 0.0
    %2156 = vmatpush1.msra.mxu0 %v1894
    %2157 = vmatprep.subr.mxu0 0.0
    %2158 = vmatpush1.msra.mxu0 %v1895
    %2159 = vmatprep.subr.mxu0 0.0
    %2160 = vmatpush1.msra.mxu0 %v1896
    %2161 = vmatprep.subr.mxu0 0.0
    %2162 = vmatpush1.msra.mxu0 %v1897
    %2163 = vmatprep.subr.mxu0 0.0
    %2164 = vmatpush1.msra.mxu0 %v1898
    %2165 = vmatprep.subr.mxu0 0.0
    %2166 = vmatpush1.msra.mxu0 %v1899
    %2167 = vmatprep.subr.mxu0 0.0
    %2168 = vmatpush1.msra.mxu0 %v1900
    %2169 = vmatprep.subr.mxu0 0.0
    %2170 = vmatpush1.msra.mxu0 %v1901
    %2171 = vmatprep.subr.mxu0 0.0
    %2172 = vmatpush1.msra.mxu0 %v1902
    %2173 = vmatprep.subr.mxu0 0.0
    %2174 = vmatpush1.msra.mxu0 %v1903
    %2175 = vmatprep.subr.mxu0 0.0
    %2176 = vmatpush1.msra.mxu0 %v1904
    %2177 = vmatprep.subr.mxu0 0.0
    %2178 = vmatpush1.msra.mxu0 %v1905
    %2179 = vmatprep.subr.mxu0 0.0
    %2180 = vmatpush1.msra.mxu0 0.0
    %2181 = vmatprep.subr.mxu0 0.0
    %2182 = vmatpush1.msra.mxu0 0.0
    %2183 = vmatprep.subr.mxu0 0.0
    %2184 = vmatpush1.msra.mxu0 0.0
    %2185 = vmatprep.subr.mxu0 0.0
    %2186 = vmatpush1.msra.mxu0 0.0
    %2187 = vmatprep.subr.mxu0 0.0
    %2188 = vmatpush1.msra.mxu0 0.0
    %2189 = vmatprep.subr.mxu0 0.0
    %2190 = vmatpush1.msra.mxu0 0.0
    %2191 = vmatprep.subr.mxu0 0.0
    %2192 = vmatpush1.msra.mxu0 0.0
    %2193 = vmatprep.subr.mxu0 0.0
    %2194 = vmatpush1.msra.mxu0 0.0
    %2195 = vmatprep.subr.mxu0 0.0
    %2196 = vmatpush1.msra.mxu0 0.0
    %2197 = vmatprep.subr.mxu0 0.0
    %2198 = vmatpush1.msra.mxu0 0.0
    %2199 = vmatprep.subr.mxu0 0.0
    %2200 = vmatpush1.msra.mxu0 0.0
    %2201 = vmatprep.subr.mxu0 0.0
    %2202 = vmatpush1.msra.mxu0 0.0
    %2203 = vmatprep.subr.mxu0 0.0
    %2204 = vmatpush1.msra.mxu0 0.0
    %2205 = vmatprep.subr.mxu0 0.0
    %2206 = vmatpush1.msra.mxu0 0.0
    %2207 = vmatprep.subr.mxu0 0.0
    %2208 = vmatpush1.msra.mxu0 0.0
    %2209 = vmatprep.subr.mxu0 0.0
    %2210 = vmatpush1.msra.mxu0 0.0
    %2211 = vmatprep.mubr.f32.mxu0 0.0
    %2212 = vmatmul.mubr.f32.gmra.mrb[0].mxu0 %v1858
    %v2213 = vpop.f32.mrb[0].mxu0
    %v2214 = vadd.f32 %v1989, %v2213
    %v2215 = vpop.f32.mrb[0].mxu0
    %2216 = vmatprep.mubr.f32.mxu0 0.0
    %2217 = vmatmul.mubr.f32.gmra.mrb[0].mxu0 %v1859
    %v2218 = vpop.f32.mrb[0].mxu0
    %v2219 = vadd.f32 %v1994, %v2218
    %v2220 = vpop.f32.mrb[0].mxu0
    %2221 = vmatprep.mubr.f32.mxu0 0.0
    %2222 = vmatmul.mubr.f32.gmra.mrb[0].mxu0 %v1860
    %v2223 = vpop.f32.mrb[0].mxu0
    %v2224 = vadd.f32 %v1999, %v2223
    %v2225 = vpop.f32.mrb[0].mxu0
    %2226 = vmatprep.mubr.f32.mxu0 0.0
    %2227 = vmatmul.mubr.f32.gmra.mrb[0].mxu0 %v1861
    %v2228 = vpop.f32.mrb[0].mxu0
    %v2229 = vadd.f32 %v2004, %v2228
    %v2230 = vpop.f32.mrb[0].mxu0
    %2231 = vmatprep.mubr.f32.mxu0 0.0
    %2232 = vmatmul.mubr.f32.gmra.mrb[0].mxu0 %v1862
    %v2233 = vpop.f32.mrb[0].mxu0
    %v2234 = vadd.f32 %v2009, %v2233
    %v2235 = vpop.f32.mrb[0].mxu0
    %2236 = vmatprep.mubr.f32.mxu0 0.0
    %2237 = vmatmul.mubr.f32.gmra.mrb[0].mxu0 %v1863
    %v2238 = vpop.f32.mrb[0].mxu0
    %v2239 = vadd.f32 %v2014, %v2238
    %v2240 = vpop.f32.mrb[0].mxu0
    %2241 = vmatprep.mubr.f32.mxu0 0.0
    %2242 = vmatmul.mubr.f32.gmra.mrb[0].mxu0 %v1864
    %v2243 = vpop.f32.mrb[0].mxu0
    %v2244 = vadd.f32 %v2019, %v2243
    %v2245 = vpop.f32.mrb[0].mxu0
    %2246 = vmatprep.mubr.f32.mxu0 0.0
    %2247 = vmatmul.mubr.f32.gmra.mrb[0].mxu0 %v1865
    %v2248 = vpop.f32.mrb[0].mxu0
    %v2249 = vadd.f32 %v2024, %v2248
    %v2250 = vpop.f32.mrb[0].mxu0
    %2251 = vmatprep.mubr.f32.mxu0 0.0
    %2252 = vmatmul.mubr.f32.gmra.mrb[0].mxu0 %v1866
    %v2253 = vpop.f32.mrb[0].mxu0
    %v2254 = vadd.f32 %v2029, %v2253
    %v2255 = vpop.f32.mrb[0].mxu0
    %2256 = vmatprep.mubr.f32.mxu0 0.0
    %2257 = vmatmul.mubr.f32.gmra.mrb[0].mxu0 %v1867
    %v2258 = vpop.f32.mrb[0].mxu0
    %v2259 = vadd.f32 %v2034, %v2258
    %v2260 = vpop.f32.mrb[0].mxu0
    %2261 = vmatprep.mubr.f32.mxu0 0.0
    %2262 = vmatmul.mubr.f32.gmra.mrb[0].mxu0 %v1868
    %v2263 = vpop.f32.mrb[0].mxu0
    %v2264 = vadd.f32 %v2039, %v2263
    %v2265 = vpop.f32.mrb[0].mxu0
    %2266 = vmatprep.mubr.f32.mxu0 0.0
    %2267 = vmatmul.mubr.f32.gmra.mrb[0].mxu0 %v1869
    %v2268 = vpop.f32.mrb[0].mxu0
    %v2269 = vadd.f32 %v2044, %v2268
    %v2270 = vpop.f32.mrb[0].mxu0
    %2271 = vmatprep.mubr.f32.mxu0 0.0
    %2272 = vmatmul.mubr.f32.gmra.mrb[0].mxu0 %v1870
    %v2273 = vpop.f32.mrb[0].mxu0
    %v2274 = vadd.f32 %v2049, %v2273
    %v2275 = vpop.f32.mrb[0].mxu0
    %2276 = vmatprep.mubr.f32.mxu0 0.0
    %2277 = vmatmul.mubr.f32.gmra.mrb[0].mxu0 %v1871
    %v2278 = vpop.f32.mrb[0].mxu0
    %v2279 = vadd.f32 %v2054, %v2278
    %v2280 = vpop.f32.mrb[0].mxu0
    %2281 = vmatprep.mubr.f32.mxu0 0.0
    %2282 = vmatmul.mubr.f32.gmra.mrb[0].mxu0 %v1872
    %v2283 = vpop.f32.mrb[0].mxu0
    %v2284 = vadd.f32 %v2059, %v2283
    %v2285 = vpop.f32.mrb[0].mxu0
    %2286 = vmatprep.mubr.f32.mxu0 0.0
    %2287 = vmatmul.mubr.f32.gmra.mrb[0].mxu0 %v1873
    %v2288 = vpop.f32.mrb[0].mxu0
    %v2289 = vadd.f32 %v2064, %v2288
    %v2290 = vpop.f32.mrb[0].mxu0
    %2291 = vmatprep.mubr.f32.mxu0 0.0
    %2292 = vmatmul.mubr.f32.gmra.mrb[0].mxu0 %v1874
    %v2293 = vpop.f32.mrb[0].mxu0
    %v2294 = vadd.f32 %v2069, %v2293
    %v2295 = vpop.f32.mrb[0].mxu0
    %2296 = vmatprep.mubr.f32.mxu0 0.0
    %2297 = vmatmul.mubr.f32.gmra.mrb[0].mxu0 %v1875
    %v2298 = vpop.f32.mrb[0].mxu0
    %v2299 = vadd.f32 %v2074, %v2298
    %v2300 = vpop.f32.mrb[0].mxu0
    %2301 = vmatprep.mubr.f32.mxu0 0.0
    %2302 = vmatmul.mubr.f32.gmra.mrb[0].mxu0 %v1876
    %v2303 = vpop.f32.mrb[0].mxu0
    %v2304 = vadd.f32 %v2079, %v2303
    %v2305 = vpop.f32.mrb[0].mxu0
    %2306 = vmatprep.mubr.f32.mxu0 0.0
    %2307 = vmatmul.mubr.f32.gmra.mrb[0].mxu0 %v1877
    %v2308 = vpop.f32.mrb[0].mxu0
    %v2309 = vadd.f32 %v2084, %v2308
    %v2310 = vpop.f32.mrb[0].mxu0
    %2311 = vmatprep.mubr.f32.mxu0 0.0
    %2312 = vmatmul.mubr.f32.gmra.mrb[0].mxu0 %v1878
    %v2313 = vpop.f32.mrb[0].mxu0
    %v2314 = vadd.f32 %v2089, %v2313
    %v2315 = vpop.f32.mrb[0].mxu0
    %2316 = vmatprep.mubr.f32.mxu0 0.0
    %2317 = vmatmul.mubr.f32.gmra.mrb[0].mxu0 %v1879
    %v2318 = vpop.f32.mrb[0].mxu0
    %v2319 = vadd.f32 %v2094, %v2318
    %v2320 = vpop.f32.mrb[0].mxu0
    %2321 = vmatprep.mubr.f32.mxu0 0.0
    %2322 = vmatmul.mubr.f32.gmra.mrb[0].mxu0 %v1880
    %v2323 = vpop.f32.mrb[0].mxu0
    %v2324 = vadd.f32 %v2099, %v2323
    %v2325 = vpop.f32.mrb[0].mxu0
    %2326 = vmatprep.mubr.f32.mxu0 0.0
    %2327 = vmatmul.mubr.f32.gmra.mrb[0].mxu0 %v1881
    %v2328 = vpop.f32.mrb[0].mxu0
    %v2329 = vadd.f32 %v2104, %v2328
    %v2330 = vpop.f32.mrb[0].mxu0
    %2331 = vmatprep.mubr.f32.mxu0 0.0
    %2332 = vmatmul.mubr.f32.gmra.mrb[0].mxu0 %v1882
    %v2333 = vpop.f32.mrb[0].mxu0
    %v2334 = vadd.f32 %v2109, %v2333
    %v2335 = vpop.f32.mrb[0].mxu0
    %2336 = vmatprep.mubr.f32.mxu0 0.0
    %2337 = vmatmul.mubr.f32.gmra.mrb[0].mxu0 %v1883
    %v2338 = vpop.f32.mrb[0].mxu0
    %v2339 = vadd.f32 %v2114, %v2338
    %v2340 = vpop.f32.mrb[0].mxu0
    %2341 = vmatprep.mubr.f32.mxu0 0.0
    %2342 = vmatmul.mubr.f32.gmra.mrb[0].mxu0 %v1884
    %v2343 = vpop.f32.mrb[0].mxu0
    %v2344 = vadd.f32 %v2119, %v2343
    %v2345 = vpop.f32.mrb[0].mxu0
    %2346 = vmatprep.mubr.f32.mxu0 0.0
    %2347 = vmatmul.mubr.f32.gmra.mrb[0].mxu0 %v1885
    %v2348 = vpop.f32.mrb[0].mxu0
    %v2349 = vadd.f32 %v2124, %v2348
    %v2350 = vpop.f32.mrb[0].mxu0
    %2351 = vmatprep.mubr.f32.mxu0 0.0
    %2352 = vmatmul.mubr.f32.gmra.mrb[0].mxu0 %v1886
    %v2353 = vpop.f32.mrb[0].mxu0
    %v2354 = vadd.f32 %v2129, %v2353
    %v2355 = vpop.f32.mrb[0].mxu0
    %2356 = vmatprep.mubr.f32.mxu0 0.0
    %2357 = vmatmul.mubr.f32.gmra.mrb[0].mxu0 %v1887
    %v2358 = vpop.f32.mrb[0].mxu0
    %v2359 = vadd.f32 %v2134, %v2358
    %v2360 = vpop.f32.mrb[0].mxu0
    %2361 = vmatprep.mubr.f32.mxu0 0.0
    %2362 = vmatmul.mubr.f32.gmra.mrb[0].mxu0 %v1888
    %v2363 = vpop.f32.mrb[0].mxu0
    %v2364 = vadd.f32 %v2139, %v2363
    %v2365 = vpop.f32.mrb[0].mxu0
    %2366 = vmatprep.mubr.f32.mxu0 0.0
    %2367 = vmatmul.mubr.f32.gmra.mrb[0].mxu0 %v1889
    %v2368 = vpop.f32.mrb[0].mxu0
    %v2369 = vadd.f32 %v2144, %v2368
    %v2370 = vpop.f32.mrb[0].mxu0
    %2371 = vdwg.mxu0
    %v2372 = vld [vmem:[%s9] sm:$0x1]
    %v2374 = vlaneseq
    %v2375 = vshrl.u32 %v2374, 7
    %v2376 = vsub.s32 0, %v2375
    %v2377 = vrot.slane %v2372, %v2376
    %v2379 = vadd.f32 %v2214, %v2377
    %v2380 = vadd.f32 %v2219, %v2377
    %v2381 = vadd.f32 %v2224, %v2377
    %v2382 = vadd.f32 %v2229, %v2377
    %v2383 = vadd.f32 %v2234, %v2377
    %v2384 = vadd.f32 %v2239, %v2377
    %v2385 = vadd.f32 %v2244, %v2377
    %v2386 = vadd.f32 %v2249, %v2377
    %v2387 = vadd.f32 %v2254, %v2377
    %v2388 = vadd.f32 %v2259, %v2377
    %v2389 = vadd.f32 %v2264, %v2377
    %v2390 = vadd.f32 %v2269, %v2377
    %v2391 = vadd.f32 %v2274, %v2377
    %v2392 = vadd.f32 %v2279, %v2377
    %v2393 = vadd.f32 %v2284, %v2377
    %v2394 = vadd.f32 %v2289, %v2377
    %v2395 = vadd.f32 %v2294, %v2377
    %v2396 = vadd.f32 %v2299, %v2377
    %v2397 = vadd.f32 %v2304, %v2377
    %v2398 = vadd.f32 %v2309, %v2377
    %v2399 = vadd.f32 %v2314, %v2377
    %v2400 = vadd.f32 %v2319, %v2377
    %v2401 = vadd.f32 %v2324, %v2377
    %v2402 = vadd.f32 %v2329, %v2377
    %v2403 = vadd.f32 %v2334, %v2377
    %v2404 = vadd.f32 %v2339, %v2377
    %v2405 = vadd.f32 %v2344, %v2377
    %v2406 = vadd.f32 %v2349, %v2377
    %v2407 = vadd.f32 %v2354, %v2377
    %v2408 = vadd.f32 %v2359, %v2377
    %v2409 = vadd.f32 %v2364, %v2377
    %v2410 = vadd.f32 %v2369, %v2377
    %v2411 = vmax.f32 %v2379, 0.0
    %v2412 = vmax.f32 %v2380, 0.0
    %v2413 = vmax.f32 %v2381, 0.0
    %v2414 = vmax.f32 %v2382, 0.0
    %v2415 = vmax.f32 %v2383, 0.0
    %v2416 = vmax.f32 %v2384, 0.0
    %v2417 = vmax.f32 %v2385, 0.0
    %v2418 = vmax.f32 %v2386, 0.0
    %v2419 = vmax.f32 %v2387, 0.0
    %v2420 = vmax.f32 %v2388, 0.0
    %v2421 = vmax.f32 %v2389, 0.0
    %v2422 = vmax.f32 %v2390, 0.0
    %v2423 = vmax.f32 %v2391, 0.0
    %v2424 = vmax.f32 %v2392, 0.0
    %v2425 = vmax.f32 %v2393, 0.0
    %v2426 = vmax.f32 %v2394, 0.0
    %v2427 = vmax.f32 %v2395, 0.0
    %v2428 = vmax.f32 %v2396, 0.0
    %v2429 = vmax.f32 %v2397, 0.0
    %v2430 = vmax.f32 %v2398, 0.0
    %v2431 = vmax.f32 %v2399, 0.0
    %v2432 = vmax.f32 %v2400, 0.0
    %v2433 = vmax.f32 %v2401, 0.0
    %v2434 = vmax.f32 %v2402, 0.0
    %v2435 = vmax.f32 %v2403, 0.0
    %v2436 = vmax.f32 %v2404, 0.0
    %v2437 = vmax.f32 %v2405, 0.0
    %v2438 = vmax.f32 %v2406, 0.0
    %v2439 = vmax.f32 %v2407, 0.0
    %v2440 = vmax.f32 %v2408, 0.0
    %v2441 = vmax.f32 %v2409, 0.0
    %v2442 = vmax.f32 %v2410, 0.0
    %v2443 = vld [vmem:[#allocation10] sm:$0xff]
    %v2444 = vld [vmem:[#allocation10 + $0x8] sm:$0xff]
    %2445 = vmatprep.subr.mxu0 0.0
    %2446 = vmatpush1.msra.mxu0 %v2411
    %2447 = vmatprep.subr.mxu0 0.0
    %2448 = vmatpush1.msra.mxu0 %v2412
    %2449 = vmatprep.subr.mxu0 0.0
    %2450 = vmatpush1.msra.mxu0 %v2413
    %2451 = vmatprep.subr.mxu0 0.0
    %2452 = vmatpush1.msra.mxu0 %v2414
    %2453 = vmatprep.subr.mxu0 0.0
    %2454 = vmatpush1.msra.mxu0 %v2415
    %2455 = vmatprep.subr.mxu0 0.0
    %2456 = vmatpush1.msra.mxu0 %v2416
    %2457 = vmatprep.subr.mxu0 0.0
    %2458 = vmatpush1.msra.mxu0 %v2417
    %2459 = vmatprep.subr.mxu0 0.0
    %2460 = vmatpush1.msra.mxu0 %v2418
    %2461 = vmatprep.subr.mxu0 0.0
    %2462 = vmatpush1.msra.mxu0 %v2419
    %2463 = vmatprep.subr.mxu0 0.0
    %2464 = vmatpush1.msra.mxu0 %v2420
    %2465 = vmatprep.subr.mxu0 0.0
    %2466 = vmatpush1.msra.mxu0 %v2421
    %2467 = vmatprep.subr.mxu0 0.0
    %2468 = vmatpush1.msra.mxu0 %v2422
    %2469 = vmatprep.subr.mxu0 0.0
    %2470 = vmatpush1.msra.mxu0 %v2423
    %2471 = vmatprep.subr.mxu0 0.0
    %2472 = vmatpush1.msra.mxu0 %v2424
    %2473 = vmatprep.subr.mxu0 0.0
    %2474 = vmatpush1.msra.mxu0 %v2425
    %2475 = vmatprep.subr.mxu0 0.0
    %2476 = vmatpush1.msra.mxu0 %v2426
    %2477 = vmatprep.subr.mxu0 0.0
    %2478 = vmatpush1.msra.mxu0 %v2427
    %2479 = vmatprep.subr.mxu0 0.0
    %2480 = vmatpush1.msra.mxu0 %v2428
    %2481 = vmatprep.subr.mxu0 0.0
    %2482 = vmatpush1.msra.mxu0 %v2429
    %2483 = vmatprep.subr.mxu0 0.0
    %2484 = vmatpush1.msra.mxu0 %v2430
    %2485 = vmatprep.subr.mxu0 0.0
    %2486 = vmatpush1.msra.mxu0 %v2431
    %2487 = vmatprep.subr.mxu0 0.0
    %2488 = vmatpush1.msra.mxu0 %v2432
    %2489 = vmatprep.subr.mxu0 0.0
    %2490 = vmatpush1.msra.mxu0 %v2433
    %2491 = vmatprep.subr.mxu0 0.0
    %2492 = vmatpush1.msra.mxu0 %v2434
    %2493 = vmatprep.subr.mxu0 0.0
    %2494 = vmatpush1.msra.mxu0 %v2435
    %2495 = vmatprep.subr.mxu0 0.0
    %2496 = vmatpush1.msra.mxu0 %v2436
    %2497 = vmatprep.subr.mxu0 0.0
    %2498 = vmatpush1.msra.mxu0 %v2437
    %2499 = vmatprep.subr.mxu0 0.0
    %2500 = vmatpush1.msra.mxu0 %v2438
    %2501 = vmatprep.subr.mxu0 0.0
    %2502 = vmatpush1.msra.mxu0 %v2439
    %2503 = vmatprep.subr.mxu0 0.0
    %2504 = vmatpush1.msra.mxu0 %v2440
    %2505 = vmatprep.subr.mxu0 0.0
    %2506 = vmatpush1.msra.mxu0 %v2441
    %2507 = vmatprep.subr.mxu0 0.0
    %2508 = vmatpush1.msra.mxu0 %v2442
    %2509 = vmatprep.mubr.f32.mxu0 %v2444
    %2510 = vmatmul.mubr.f32.gmra.mrb[0].mxu0 %v2443
    %v2511 = vpop.f32.mrb[0].mxu0
    %v2512 = vadd.f32 0.0, %v2511
    %v2513 = vpop.f32.mrb[0].mxu0
    %2514 = vdwg.mxu0
    %2515 = vst [vmem:[#allocation17] sm:$0xff] %v2512
    // Predicated region
    $region78: #{mpn_forward.1} parent=1 // pred_check
      _
    $region79: #{mpn_forward.1} parent=1 // pred_check_branch
      %2517 = sbr.rel (0) target = $region81
    $region80: #{mpn_forward.1} parent=1 // pred_region
      %s2519 = ssub.s32 128, 128
      %2520 = vsyncadd [#allocation4], %s2519
      %s2522 = sshll.u32 [#allocation17], 4
      %s2523 = int_to_ptr.vmem [resolvable:$true] %s2522
      %2525 = dma.vmem_to_hbm [thread:$0]  %s2523, 128, %s10, [#allocation4]
    $region81: #{mpn_forward.1} parent=1 // pred_fallthru
      _
    // Predicated region
    $region82: #{mpn_forward.1} parent=1 // pred_check
      _
    $region83: #{mpn_forward.1} parent=1 // pred_check_branch
      %2527 = sbr.rel (0) target = $region85
    $region84: #{mpn_forward.1} parent=1 // pred_region
      %2528 = dma.done [#allocation4], 128
    $region85: #{mpn_forward.1} parent=1 // pred_fallthru
      _
    %2529 = vsyncpa [#allocation3], 1
    %2530 = vsyncpa [#allocation6], 1
    %2531 = vsyncpa [#allocation9], 1
    %2532 = vsyncpa [#allocation12], 1
    %2533 = vsyncpa [#allocation15], 1
    %2534 = vsyncpa [#allocation4], 1

</llo_original>
